<compile_context>
chip_gen: v6e
topology: v6e:2x2x1
jax: 0.10.0
libtpu: 0.0.40
codegen_flags: <defaults>
</compile_context>

<pallas_src>
import math
import functools

import jax
import jax.numpy as jnp
from jax.experimental import pallas as pl
from jax.experimental.pallas import tpu as pltpu

EXPANSION = 4          # Bottleneck.expansion
BN_EPS = 1e-5


def _rup(a, b):
    return (a + b - 1) // b * b


# ----------------------------------------------------------------------------
# Adaptive tile selection (avoid padding / slicing whenever the dims allow it)
# ----------------------------------------------------------------------------
def _pick_tm(M):
    """Return (Mp, tm): tm divides Mp, tm % 8 == 0 (or Mp == tm), Mp >= M."""
    Mp = _rup(M, 8)
    if Mp <= 512:
        return Mp, Mp
    for tm in range(512, 63, -8):
        if Mp % tm == 0:
            return Mp, tm
    return _rup(M, 256), 256


def _pick_tn(N):
    """Return (Np, tn): lane-dim tile, 256 preferred (MXU width on v6e/v7x)."""
    if N <= 128:
        return N, N                      # full-dim block (e.g. C_out = 64)
    Np = _rup(N, 128)
    for tn in (256, 128):
        if Np % tn == 0:
            return Np, tn
    return Np, 128


def _pick_tk(K):
    """Return (Kp, tk): single full-K step when it fits, else an exact divisor."""
    if K <= 2048:
        return K, K
    for tk in (2048, 1536, 1280, 1152, 1024, 896, 768, 640, 512, 384, 256, 128):
        if K % tk == 0:
            return K, tk
    return _rup(K, 512), 512


# ----------------------------------------------------------------------------
# Fused GEMM + bias (+ residual) (+ ReLU) Pallas kernel (bf16 in, f32 acc)
# ----------------------------------------------------------------------------
@functools.lru_cache(maxsize=None)
def _gemm_kernel(apply_relu: bool, has_residual: bool, single_k: bool):
    if single_k:
        def kernel(x_ref, w_ref, b_ref, *refs):
            if has_residual:
                r_ref, o_ref = refs
            else:
                (o_ref,) = refs
            y = jnp.dot(x_ref[...], w_ref[...],
                        preferred_element_type=jnp.float32)
            y = y + b_ref[...]
            if has_residual:
                y = y + r_ref[...].astype(jnp.float32)
            if apply_relu:
                y = jnp.maximum(y, 0.0)
            o_ref[...] = y.astype(o_ref.dtype)
        return kernel

    def kernel(x_ref, w_ref, b_ref, *refs):
        if has_residual:
            r_ref, o_ref, acc_ref = refs
        else:
            o_ref, acc_ref = refs

        @pl.when(pl.program_id(2) == 0)
        def _init():
            acc_ref[...] = jnp.zeros_like(acc_ref)

        acc_ref[...] += jnp.dot(x_ref[...], w_ref[...],
                                preferred_element_type=jnp.float32)

        @pl.when(pl.program_id(2) == pl.num_programs(2) - 1)
        def _finalize():
            y = acc_ref[...] + b_ref[...]
            if has_residual:
                y = y + r_ref[...].astype(jnp.float32)
            if apply_relu:
                y = jnp.maximum(y, 0.0)
            o_ref[...] = y.astype(o_ref.dtype)

    return kernel


def fused_gemm(x, w, bias, residual=None, relu=True, out_dtype=jnp.bfloat16):
    """y[:M,:N] = act((x @ w) + bias [+ residual]) with bf16 MXU inputs."""
    M, K = x.shape
    Kw, N = w.shape
    assert K == Kw, (K, Kw)

    Mp, tm = _pick_tm(M)
    Np, tn = _pick_tn(N)
    Kp, tk = _pick_tk(K)

    xp = x.astype(jnp.bfloat16)
    if (Mp, Kp) != (M, K):
        xp = jnp.pad(xp, ((0, Mp - M), (0, Kp - K)))
    wp = w.astype(jnp.bfloat16)
    if (Kp, Np) != (K, N):
        wp = jnp.pad(wp, ((0, Kp - K), (0, Np - N)))
    bp = bias.astype(jnp.float32)
    if Np != N:
        bp = jnp.pad(bp, (0, Np - N))
    bp = bp.reshape(1, Np)

    has_res = residual is not None
    nk = Kp // tk
    single_k = (nk == 1)

    if single_k:
        grid = (Mp // tm, Np // tn)
        x_spec = pl.BlockSpec((tm, tk), lambda i, j: (i, 0))
        w_spec = pl.BlockSpec((tk, tn), lambda i, j: (0, j))
        b_spec = pl.BlockSpec((1, tn), lambda i, j: (0, j))
        mn_spec = pl.BlockSpec((tm, tn), lambda i, j: (i, j))
        scratch = []
        sem = ("parallel", "parallel")
    else:
        grid = (Mp // tm, Np // tn, nk)
        x_spec = pl.BlockSpec((tm, tk), lambda i, j, k: (i, k))
        w_spec = pl.BlockSpec((tk, tn), lambda i, j, k: (k, j))
        b_spec = pl.BlockSpec((1, tn), lambda i, j, k: (0, j))
        mn_spec = pl.BlockSpec((tm, tn), lambda i, j, k: (i, j))
        scratch = [pltpu.VMEM((tm, tn), jnp.float32)]
        sem = ("parallel", "parallel", "arbitrary")

    in_specs = [x_spec, w_spec, b_spec]
    args = [xp, wp, bp]
    if has_res:
        rp = residual.astype(jnp.bfloat16)
        if (Mp, Np) != (M, N):
            rp = jnp.pad(rp, ((0, Mp - M), (0, Np - N)))
        in_specs.append(mn_spec)
        args.append(rp)

    out = pl.pallas_call(
        _gemm_kernel(bool(relu), has_res, single_k),
        out_shape=jax.ShapeDtypeStruct((Mp, Np), out_dtype),
        grid_spec=pltpu.PrefetchScalarGridSpec(
            num_scalar_prefetch=0,
            grid=grid,
            in_specs=in_specs,
            out_specs=mn_spec,
            scratch_shapes=scratch,
        ),
        compiler_params=pltpu.CompilerParams(dimension_semantics=sem),
    )(*args)

    if (Mp, Np) != (M, N):
        out = out[:M, :N]
    return out


# ----------------------------------------------------------------------------
# Pooling kernels
# ----------------------------------------------------------------------------
def _maxpool_kernel(x_ref, o_ref):
    # x_ref: (9, tm, lanes) -- 9 window taps; elementwise max over taps.
    o_ref[...] = jnp.max(x_ref[...], axis=0)


def maxpool_3x3_s2_ceil(x):
    """MaxPool2d(kernel_size=3, stride=2, padding=0, ceil_mode=True) on NHWC."""
    B, H, W, C = x.shape
    Hout = -(-(H - 3) // 2) + 1
    Wout = -(-(W - 3) // 2) + 1
    padH = max(0, 2 * (Hout - 1) + 3 - H)
    padW = max(0, 2 * (Wout - 1) + 3 - W)
    xp = jnp.pad(x, ((0, 0), (0, padH), (0, padW), (0, 0)),
                 constant_values=float("-inf"))
    taps = [xp[:, i:i + 2 * (Hout - 1) + 1:2, j:j + 2 * (Wout - 1) + 1:2, :]
            for i in range(3) for j in range(3)]
    stk = jnp.stack(taps, axis=0)                  # (9, B, Hout, Wout, C)

    flat = B * Hout * Wout * C
    lanes = 128 if flat % 128 == 0 else C          # lane-dense reshape when possible
    rows = flat // lanes
    stk = stk.reshape(9, rows, lanes)

    rows_p, tm = _pick_tm(rows)
    if rows_p != rows:
        stk = jnp.pad(stk, ((0, 0), (0, rows_p - rows), (0, 0)),
                      constant_values=float("-inf"))

    out = pl.pallas_call(
        _maxpool_kernel,
        out_shape=jax.ShapeDtypeStruct((rows_p, lanes), x.dtype),
        grid=(rows_p // tm,),
        in_specs=[pl.BlockSpec((9, tm, lanes), lambda i: (0, i, 0))],
        out_specs=pl.BlockSpec((tm, lanes), lambda i: (i, 0)),
        compiler_params=pltpu.CompilerParams(dimension_semantics=("parallel",)),
    )(stk)
    if rows_p != rows:
        out = out[:rows]
    return out.reshape(B, Hout, Wout, C)


def _avgpool_kernel(x_ref, o_ref):
    o_ref[...] = jnp.mean(x_ref[...].astype(jnp.float32), axis=1)


def global_avgpool(x):
    """AvgPool2d(7) on a (B, 7, 7, C) NHWC tensor -> (B, C) in f32."""
    B, H, W, C = x.shape
    xr = x.reshape(B, H * W, C)
    return pl.pallas_call(
        _avgpool_kernel,
        out_shape=jax.ShapeDtypeStruct((B, C), jnp.float32),
        grid=(1,),
        in_specs=[pl.BlockSpec((B, H * W, C), lambda i: (0, 0, 0))],
        out_specs=pl.BlockSpec((B, C), lambda i: (0, 0)),
    )(xr)


# ----------------------------------------------------------------------------
# Conv = im2col (bf16 glue) + fused Pallas GEMM with pre-folded BN weights
# ----------------------------------------------------------------------------
def im2col(x, kh, kw, stride, pad):
    if pad:
        x = jnp.pad(x, ((0, 0), (pad, pad), (pad, pad), (0, 0)))
    B, H, W, C = x.shape
    Hout = (H - kh) // stride + 1
    Wout = (W - kw) // stride + 1
    if kh == 1 and kw == 1:
        cols = x[:, ::stride, ::stride, :][:, :Hout, :Wout, :]
        return cols.reshape(B * Hout * Wout, C), Hout, Wout
    taps = []
    for i in range(kh):
        for j in range(kw):
            taps.append(x[:, i:i + stride * (Hout - 1) + 1:stride,
                          j:j + stride * (Wout - 1) + 1:stride, :])
    cols = jnp.stack(taps, axis=3)                 # (B, Hout, Wout, kh*kw, C)
    return cols.reshape(B * Hout * Wout, kh * kw * C), Hout, Wout


def fold_conv_bn(w, bn, stride, pad):
    """Fold eval-mode BN into the conv weight; store a bf16 GEMM matrix + f32 bias."""
    cout, cin, kh, kw = w.shape
    scale = bn["gamma"] / jnp.sqrt(bn["var"] + BN_EPS)
    bias = (bn["beta"] - bn["mean"] * scale).astype(jnp.float32)
    cin_p = _rup(cin, 8)                           # only the stem (cin=3) gets padded
    wt = jnp.transpose(w, (2, 3, 1, 0)) * scale    # (kh, kw, cin, cout)
    if cin_p != cin:
        wt = jnp.pad(wt, ((0, 0), (0, 0), (0, cin_p - cin), (0, 0)))
    wmat = wt.reshape(kh * kw * cin_p, cout).astype(jnp.bfloat16)
    return dict(w=wmat, b=bias, k=kh, stride=stride, pad=pad,
                cin=cin_p, cout=cout)


def conv_apply(x, cp, relu=True, residual=None):
    """conv2d(bias=False) -> BN(eval) [-> +residual] [-> ReLU] on NHWC bf16."""
    cin = x.shape[-1]
    if cin != cp["cin"]:
        x = jnp.pad(x, ((0, 0), (0, 0), (0, 0), (0, cp["cin"] - cin)))
    cols, Hout, Wout = im2col(x, cp["k"], cp["k"], cp["stride"], cp["pad"])
    r = residual.reshape(-1, cp["cout"]) if residual is not None else None
    y = fused_gemm(cols, cp["w"], cp["b"], residual=r, relu=relu,
                   out_dtype=jnp.bfloat16)
    return y.reshape(x.shape[0], Hout, Wout, cp["cout"])


def bottleneck(x, blk):
    if blk["ds"] is not None:
        identity = conv_apply(x, blk["ds"], relu=False)
    else:
        identity = x
    out = conv_apply(x, blk["c1"], relu=True)
    out = conv_apply(out, blk["c2"], relu=True)
    # bn3(conv3) + identity -> ReLU, fused in the GEMM epilogue.
    out = conv_apply(out, blk["c3"], relu=True, residual=identity)
    return out


# ----------------------------------------------------------------------------
# Parameter construction (mirrors ResNet.__init__ / _make_layer init scheme)
# ----------------------------------------------------------------------------
def init_params(key, layers, num_classes=1000):
    keys = iter(jax.random.split(key, 256))

    def conv(cout, cin, k, stride, pad):
        n = k * k * cout
        w = jax.random.normal(next(keys), (cout, cin, k, k),
                              jnp.float32) * math.sqrt(2.0 / n)
        bn = dict(gamma=jnp.ones((cout,), jnp.float32),
                  beta=jnp.zeros((cout,), jnp.float32),
                  mean=jnp.zeros((cout,), jnp.float32),
                  var=jnp.ones((cout,), jnp.float32))
        return fold_conv_bn(w, bn, stride, pad)

    params = {"conv1": conv(64, 3, 7, 2, 3), "num_classes": num_classes}
    inplanes = 64
    plan = [(64, layers[0], 1), (128, layers[1], 2),
            (256, layers[2], 2), (512, layers[3], 2)]
    all_layers = []
    for planes, blocks, stride in plan:
        blist = []
        for b in range(blocks):
            s = stride if b == 0 else 1
            blk = {"ds": None}
            if b == 0 and (s != 1 or inplanes != planes * EXPANSION):
                blk["ds"] = conv(planes * EXPANSION, inplanes, 1, s, 0)
            blk["c1"] = conv(planes, inplanes, 1, 1, 0)
            blk["c2"] = conv(planes, planes, 3, s, 1)
            blk["c3"] = conv(planes * EXPANSION, planes, 1, 1, 0)
            blist.append(blk)
            inplanes = planes * EXPANSION
        all_layers.append(blist)
    params["layers"] = all_layers

    fin = 512 * EXPANSION
    bound = 1.0 / math.sqrt(fin)
    fc_w = jax.random.uniform(next(keys), (num_classes, fin),
                              jnp.float32, -bound, bound)
    fc_b = jax.random.uniform(next(keys), (num_classes,),
                              jnp.float32, -bound, bound)
    ncp, _ = _pick_tn(num_classes)
    params["fc_w"] = jnp.pad(fc_w.T, ((0, 0), (0, ncp - num_classes))
                             ).astype(jnp.bfloat16)      # (fin, ncp), pre-transposed
    params["fc_b"] = jnp.pad(fc_b, (0, ncp - num_classes)).astype(jnp.float32)
    return params


# ----------------------------------------------------------------------------
# Forward pass (matches ResNet.forward)
# ----------------------------------------------------------------------------
def resnet_forward(params, x_nchw):
    x = jnp.transpose(x_nchw, (0, 2, 3, 1)).astype(jnp.bfloat16)   # NCHW -> NHWC bf16
    x = conv_apply(x, params["conv1"], relu=True)
    x = maxpool_3x3_s2_ceil(x)
    for layer in params["layers"]:
        for blk in layer:
            x = bottleneck(x, blk)
    feat = global_avgpool(x)                                       # (B, 512*exp) f32
    logits = fused_gemm(feat, params["fc_w"], params["fc_b"],
                        relu=False, out_dtype=jnp.float32)
    return logits[:, :params["num_classes"]]                       # (B, num_classes)


if __name__ == "__main__":
    # Spatial size must be 224 so layer4 outputs 7x7 (AvgPool2d(7) + Linear require it).
    # LAYERS=(1,1,1,1) keeps the demo small; (3,4,6,3) is the real ResNet-50.
    LAYERS = (1, 1, 1, 1)
    NUM_CLASSES = 1000
    B, H, W = 2, 224, 224

    key = jax.random.PRNGKey(0)
    kx, kp = jax.random.split(key)
    x = jax.random.normal(kx, (B, 3, H, W), jnp.float32)
    params = init_params(kp, LAYERS, NUM_CLASSES)

    out = resnet_forward(params, x)
    out = jax.block_until_ready(out)

    assert out.shape == (B, NUM_CLASSES), out.shape
    assert bool(jnp.all(jnp.isfinite(out)))
    print("KERNEL_OK")
</pallas_src>

<mosaic_0001>
module attributes {stable_mosaic.version = 11 : i64} {
  func.func @kernel(%arg0: i32, %arg1: i32, %arg2: memref<512x392xbf16, #tpu.memory_space<vmem>>, %arg3: memref<392x64xbf16, #tpu.memory_space<vmem>>, %arg4: memref<1x64xf32, #tpu.memory_space<vmem>>, %arg5: memref<512x64xbf16, #tpu.memory_space<vmem>>) attributes {dimension_semantics = [#tpu.dimension_semantics<parallel>, #tpu.dimension_semantics<parallel>], iteration_bounds = array<i64: 49, 1>, scalar_prefetch = 0 : i64, scratch_operands = 0 : i64, tpu.core_type = #tpu.core_type<tc>, window_params = [{transform_indices = @transform_0, window_bounds = array<i64: 512, 392>}, {transform_indices = @transform_1, window_bounds = array<i64: 392, 64>}, {transform_indices = @transform_2, window_bounds = array<i64: 1, 64>}, {transform_indices = @transform_3, window_bounds = array<i64: 512, 64>}]} {
    %c0 = arith.constant 0 : index
    %c0_0 = arith.constant 0 : index
    %0 = vector.load %arg2[%c0, %c0_0] : memref<512x392xbf16, #tpu.memory_space<vmem>>, vector<512x392xbf16>
    %c0_1 = arith.constant 0 : index
    %c0_2 = arith.constant 0 : index
    %1 = vector.load %arg3[%c0_1, %c0_2] : memref<392x64xbf16, #tpu.memory_space<vmem>>, vector<392x64xbf16>
    %cst = arith.constant dense<0.000000e+00> : vector<512x64xf32>
    %2 = tpu.matmul %0, %1, %cst {dimension_numbers = #tpu.dot_dimension_numbers<[1], [0], [0], [1], [0, 0, 1, 1], [], []>} : vector<512x392xbf16>, vector<392x64xbf16>, vector<512x64xf32> -> vector<512x64xf32>
    %c0_3 = arith.constant 0 : index
    %c0_4 = arith.constant 0 : index
    %3 = vector.load %arg4[%c0_3, %c0_4] : memref<1x64xf32, #tpu.memory_space<vmem>>, vector<1x64xf32>
    %4 = vector.broadcast %3 : vector<1x64xf32> to vector<512x64xf32>
    %5 = arith.addf %2, %4 : vector<512x64xf32>
    %cst_5 = arith.constant 0.000000e+00 : f32
    %6 = vector.broadcast %cst_5 : f32 to vector<512x64xf32>
    %7 = arith.maximumf %5, %6 : vector<512x64xf32>
    %8 = arith.truncf %7 : vector<512x64xf32> to vector<512x64xbf16>
    %c0_6 = arith.constant 0 : index
    %c0_7 = arith.constant 0 : index
    %9 = vector.load %arg5[%c0_6, %c0_7] : memref<512x64xbf16, #tpu.memory_space<vmem>>, vector<512x64xbf16>
    tpu.vector_store %arg5[%c0_6, %c0_7], %8 {strides = array<i32>} : memref<512x64xbf16, #tpu.memory_space<vmem>>, vector<512x64xbf16>,
    return
  }
  func.func @transform_0(%arg0: i32, %arg1: i32) -> (i32, i32) {
    %c0_i32 = arith.constant 0 : i32
    %c0_i32_0 = arith.constant 0 : i32
    return %arg0, %c0_i32 : i32, i32
  }
  func.func @transform_1(%arg0: i32, %arg1: i32) -> (i32, i32) {
    %c0_i32 = arith.constant 0 : i32
    %c0_i32_0 = arith.constant 0 : i32
    return %c0_i32, %arg1 : i32, i32
  }
  func.func @transform_2(%arg0: i32, %arg1: i32) -> (i32, i32) {
    %c0_i32 = arith.constant 0 : i32
    %c0_i32_0 = arith.constant 0 : i32
    return %c0_i32, %arg1 : i32, i32
  }
  func.func @transform_3(%arg0: i32, %arg1: i32) -> (i32, i32) {
    %c0_i32 = arith.constant 0 : i32
    return %arg0, %arg1 : i32, i32
  }
}

</mosaic_0001>

<llo_original>
// kernel: tpu_custom_call.1
$region0: #{tpu_custom_call.1}
  #allocation0 [shape = 'u32[]', space=smem, size = 0x4, offset = 0x4, fixed_abs, tag = 'smem constant byte address 0x4 - core index']
  #allocation1 [shape = 'u32[144,128]{1,0:T(1,128)}', space=vmem, size = 0x12000, scoped, tag = 'internal scratch']
  %s0 = inlined_call_operand.vmem [shape: bf16[25088,392], index: 0, kind: input, shape index: {}]
  %s1 = inlined_call_operand.vmem [shape: bf16[392,64], index: 1, kind: input, shape index: {}]
  %s2 = inlined_call_operand.vmem [shape: f32[1,64], index: 2, kind: input, shape index: {}]
  %s3 = inlined_call_operand.vmem [shape: bf16[25088,64], index: 3, kind: output, shape index: {}]
  %s4 = sld [smem:[#allocation0]]
  $region45: #{tpu_custom_call.1} parent=0
    _
  %s6 = ssub.s32 1, %s4
  %s7 = scalar_select 0, %s6, %s4
  loop: start=0, step=1, limit=51
  $region2: #{tpu_custom_call.1} parent=0 // loop_pre_header
    _
  $region3: #{tpu_custom_call.1} parent=0 // loop_header
    %s9 = sphi 0, %s13
    %p10 = scmp.ge.s32.totalorder %s9, 51
    %s16 = sphi 0, %s28
    %s17 = sphi 0, %s24
    %s18 = sphi 0, %s16
    %s19 = sphi 0, %s17
    %s20 = sphi 0, %s18
    %s21 = sphi 0, %s19
    %s31 = sphi 0, %s33
    %s34 = sphi 0, %s31
    %s35 = sphi 0, %s34
    %s51 = sphi 0, %s35
    %s57 = sphi 0, %s59
    %s60 = sphi 0, %s57
    %s61 = sphi 0, %s60
    %s77 = sphi 0, %s61
    %s83 = sphi 0, %s85
    %s86 = sphi 0, %s83
    %s87 = sphi 0, %s86
    %s103 = sphi 0, %s87
    %s111 = sphi 0, %s113
    %s114 = sphi 0, %s111
    %s115 = sphi 0, %s114
    %s131 = sphi 0, %s115
  $region4: #{tpu_custom_call.1} parent=0 // loop_header_branch
    %12 = sbr.rel (%p10) target = $region8
  $region5: #{tpu_custom_call.1} parent=0 // loop_body
    %s14 = ssub.s32 %s9, 1
    %s15 = ssub.s32 %s9, 2
    %s22 = sadd.s32 1, %s17
    %p23 = scmp.ge.s32.totalorder %s22, 1
    %s24 = scalar_select %p23, 0, %s22
    %s25 = sadd.s32 1, %s16
    %s26 = scalar_select %p23, %s25, %s16
    %p27 = scmp.ge.s32.totalorder %s26, 49
    %s28 = scalar_select %p27, 0, %s26
    %s29 = ssub.s32 %s16, %s28
    %p30 = scmp.eq.s32.totalorder %s29, 0
    %s32 = sadd.s32 %s31, 1
    %s33 = scalar_select %p30, %s31, %s32
    %p36 = pneg %p30
    %p37 = scmp.eq.s32.totalorder %s9, 48
    %p38 = por %p36, %p37
    %p39 = scmp.ne.s32.totalorder %s31, %s34
    %p40 = scmp.eq.s32.totalorder %s9, 0
    %p41 = por %p39, %p40
    %p42 = scmp.ne.s32.totalorder %s31, %s34
    %p43 = scmp.eq.s32.totalorder %s14, 48
    %p44 = por %p42, %p43
    %p45 = scmp.ne.s32.totalorder %s34, %s35
    %p46 = scmp.eq.s32.totalorder %s14, 0
    %p47 = por %p45, %p46
    %p48 = scmp.ne.s32.totalorder %s34, %s35
    %p49 = scmp.eq.s32.totalorder %s15, 48
    %p50 = por %p48, %p49
    %p52 = scmp.ne.s32.totalorder %s35, %s51
    %p53 = scmp.eq.s32.totalorder %s15, 0
    %p54 = por %p52, %p53
    %s55 = ssub.s32 %s17, %s24
    %p56 = scmp.eq.s32.totalorder %s55, 0
    %s58 = sadd.s32 %s57, 1
    %s59 = scalar_select %p56, %s57, %s58
    %p62 = pneg %p56
    %p63 = scmp.eq.s32.totalorder %s9, 48
    %p64 = por %p62, %p63
    %p65 = scmp.ne.s32.totalorder %s57, %s60
    %p66 = scmp.eq.s32.totalorder %s9, 0
    %p67 = por %p65, %p66
    %p68 = scmp.ne.s32.totalorder %s57, %s60
    %p69 = scmp.eq.s32.totalorder %s14, 48
    %p70 = por %p68, %p69
    %p71 = scmp.ne.s32.totalorder %s60, %s61
    %p72 = scmp.eq.s32.totalorder %s14, 0
    %p73 = por %p71, %p72
    %p74 = scmp.ne.s32.totalorder %s60, %s61
    %p75 = scmp.eq.s32.totalorder %s15, 48
    %p76 = por %p74, %p75
    %p78 = scmp.ne.s32.totalorder %s61, %s77
    %p79 = scmp.eq.s32.totalorder %s15, 0
    %p80 = por %p78, %p79
    %s81 = ssub.s32 %s17, %s24
    %p82 = scmp.eq.s32.totalorder %s81, 0
    %s84 = sadd.s32 %s83, 1
    %s85 = scalar_select %p82, %s83, %s84
    %p88 = pneg %p82
    %p89 = scmp.eq.s32.totalorder %s9, 48
    %p90 = por %p88, %p89
    %p91 = scmp.ne.s32.totalorder %s83, %s86
    %p92 = scmp.eq.s32.totalorder %s9, 0
    %p93 = por %p91, %p92
    %p94 = scmp.ne.s32.totalorder %s83, %s86
    %p95 = scmp.eq.s32.totalorder %s14, 48
    %p96 = por %p94, %p95
    %p97 = scmp.ne.s32.totalorder %s86, %s87
    %p98 = scmp.eq.s32.totalorder %s14, 0
    %p99 = por %p97, %p98
    %p100 = scmp.ne.s32.totalorder %s86, %s87
    %p101 = scmp.eq.s32.totalorder %s15, 48
    %p102 = por %p100, %p101
    %p104 = scmp.ne.s32.totalorder %s87, %s103
    %p105 = scmp.eq.s32.totalorder %s15, 0
    %p106 = por %p104, %p105
    %s107 = ssub.s32 %s16, %s28
    %s108 = ssub.s32 %s17, %s24
    %s109 = sor.u32 %s107, %s108
    %p110 = scmp.eq.s32.totalorder %s109, 0
    %s112 = sadd.s32 %s111, 1
    %s113 = scalar_select %p110, %s111, %s112
    %p116 = pneg %p110
    %p117 = scmp.eq.s32.totalorder %s9, 48
    %p118 = por %p116, %p117
    %p119 = scmp.ne.s32.totalorder %s111, %s114
    %p120 = scmp.eq.s32.totalorder %s9, 0
    %p121 = por %p119, %p120
    %p122 = scmp.ne.s32.totalorder %s111, %s114
    %p123 = scmp.eq.s32.totalorder %s14, 48
    %p124 = por %p122, %p123
    %p125 = scmp.ne.s32.totalorder %s114, %s115
    %p126 = scmp.eq.s32.totalorder %s14, 0
    %p127 = por %p125, %p126
    %p128 = scmp.ne.s32.totalorder %s114, %s115
    %p129 = scmp.eq.s32.totalorder %s15, 48
    %p130 = por %p128, %p129
    %p132 = scmp.ne.s32.totalorder %s115, %s131
    %p133 = scmp.eq.s32.totalorder %s15, 0
    %p134 = por %p132, %p133
    %p135 = scmp.le.s32.totalorder 1, %s9
    %p136 = scmp.lt.s32.totalorder %s9, 50
    %p137 = pnand %p135, %p136
    %p138 = pneg %p137
    // Predicated region
    $region9: #{tpu_custom_call.1} parent=5 // pred_check
      _
    $region10: #{tpu_custom_call.1} parent=5 // pred_check_branch
      %140 = sbr.rel (%p137) target = $region12
    $region11: #{tpu_custom_call.1} parent=5 // pred_region
      %s141 = ssub.s32 %s9, 1
      // Predicated region
      $region13: #{tpu_custom_call.1} parent=11 // pred_check
        %p142 = pneg %p73
      $region14: #{tpu_custom_call.1} parent=11 // pred_check_branch
        %144 = sbr.rel (%p142) target = $region16
      $region15: #{tpu_custom_call.1} parent=11 // pred_region
        %p145 = scmp.lt.s32.totalorder %s19, 0
        %s146 = scalar_select %p145, %s19, 0
        %s147 = smul.addr %s146, 4
        %s148 = scalar_lea.vmem %s1, %s147
      $region16: #{tpu_custom_call.1} parent=11 // pred_fallthru
        _
      // Predicated region
      $region17: #{tpu_custom_call.1} parent=11 // pred_check
        %p149 = pneg %p99
      $region18: #{tpu_custom_call.1} parent=11 // pred_check_branch
        %151 = sbr.rel (%p149) target = $region20
      $region19: #{tpu_custom_call.1} parent=11 // pred_region
        %p152 = scmp.lt.s32.totalorder %s19, 0
        %s153 = scalar_select %p152, %s19, 0
        %s154 = scalar_lea.vmem %s2, %s153
      $region20: #{tpu_custom_call.1} parent=11 // pred_fallthru
        _
    $region12: #{tpu_custom_call.1} parent=5 // pred_fallthru
      _
    %p155 = scmp.lt.s32.totalorder %s9, 49
    // Predicated region
    $region21: #{tpu_custom_call.1} parent=5 // pred_check
      %p156 = pneg %p155
    $region22: #{tpu_custom_call.1} parent=5 // pred_check_branch
      %158 = sbr.rel (%p156) target = $region24
    $region23: #{tpu_custom_call.1} parent=5 // pred_region
      // Predicated region
      $region25: #{tpu_custom_call.1} parent=23 // pred_check
        %p159 = pneg %p41
      $region26: #{tpu_custom_call.1} parent=23 // pred_check_branch
        %161 = sbr.rel (%p159) target = $region28
      $region27: #{tpu_custom_call.1} parent=23 // pred_region
        %s162 = smul.u32 64, %s16
        %p163 = scmp.lt.s32.totalorder %s162, 3135
        %s164 = scalar_select %p163, %s162, 3135
        %s165 = smul.addr %s164, 4
        %s166 = smul.addr %s165, 4
        %s167 = scalar_lea.vmem %s0, %s166
        %s168 = smul.u32 64, %s16
      $region28: #{tpu_custom_call.1} parent=23 // pred_fallthru
        _
    $region24: #{tpu_custom_call.1} parent=5 // pred_fallthru
      _
    %p169 = scmp.le.s32.totalorder 1, %s9
    %p170 = scmp.lt.s32.totalorder %s9, 50
    %p171 = pnand %p169, %p170
    %p172 = pneg %p171
    // Predicated region
    $region29: #{tpu_custom_call.1} parent=5 // pred_check
      _
    $region30: #{tpu_custom_call.1} parent=5 // pred_check_branch
      %174 = sbr.rel (%p171) target = $region32
    $region31: #{tpu_custom_call.1} parent=5 // pred_region
      %s175 = ssub.s32 %s9, 1
      %s176 = smul.u32 64, %s18
      %p177 = scmp.lt.s32.totalorder %s176, 3135
      %s178 = scalar_select %p177, %s176, 3135
      %s179 = smul.addr %s178, 4
      %s180 = smul.addr %s179, 4
      %s181 = scalar_lea.vmem %s0, %s180
      %p182 = pneg %p47
      %p183 = pneg %p44
      %p184 = scmp.lt.s32.totalorder %s19, 0
      %s185 = scalar_select %p184, %s19, 0
      %s186 = smul.addr %s185, 4
      %s187 = scalar_lea.vmem %s1, %s186
      %p188 = pneg %p73
      %p189 = pneg %p70
      %p190 = scmp.lt.s32.totalorder %s19, 0
      %s191 = scalar_select %p190, %s19, 0
      %s192 = scalar_lea.vmem %s2, %s191
      %p193 = pneg %p99
      %p194 = pneg %p96
      %p195 = pneg %p127
      %p196 = pneg %p124
      %s197 = smul.u32 64, %s18
      %p198 = scmp.lt.s32.totalorder %s197, 3135
      %s199 = scalar_select %p198, %s197, 3135
      %p200 = scmp.lt.s32.totalorder %s19, 0
      %s201 = scalar_select %p200, %s19, 0
      %s202 = sadd.s32 %s201, %s199
      %s203 = smul.addr %s202, 4
      %s204 = scalar_lea.vmem %s3, %s203
      %s205 = smul.u32 64, %s18
      %p206 = scmp.lt.s32.totalorder %s205, 3135
      %s207 = scalar_select %p206, %s205, 3135
      %s208 = smul.addr %s207, 4
      %s209 = smul.addr %s208, 4
      %s210 = scalar_lea.vmem %s0, %s209
      %s211 = smul.u32 64, %s18
      %p212 = scmp.lt.s32.totalorder %s19, 0
      %s213 = scalar_select %p212, %s19, 0
      %s214 = smul.addr %s213, 4
      %s215 = scalar_lea.vmem %s1, %s214
      %p216 = scmp.lt.s32.totalorder %s19, 0
      %s217 = scalar_select %p216, %s19, 0
      %s218 = scalar_lea.vmem %s2, %s217
      %s219 = smul.u32 64, %s18
      %p220 = scmp.lt.s32.totalorder %s219, 3135
      %s221 = scalar_select %p220, %s219, 3135
      %p222 = scmp.lt.s32.totalorder %s19, 0
      %s223 = scalar_select %p222, %s19, 0
      %s224 = sadd.s32 %s223, %s221
      %s225 = smul.addr %s224, 4
      %s226 = scalar_lea.vmem %s3, %s225
      %s227 = smul.u32 64, %s18
      %v229 = vld [vmem:[%s210] sm:$0xff]
      %v230 = vld [vmem:[%s210 + $0x8] sm:$0xff]
      %v231 = vld [vmem:[%s210 + $0x10] sm:$0xff]
      %v232 = vld [vmem:[%s210 + $0x18] sm:$0xff]
      %v233 = vld [vmem:[%s210 + $0x20] sm:$0xff]
      %v234 = vld [vmem:[%s210 + $0x28] sm:$0xff]
      %v235 = vld [vmem:[%s210 + $0x30] sm:$0xff]
      %v236 = vld [vmem:[%s210 + $0x38] sm:$0xff]
      %v237 = vld [vmem:[%s210 + $0x40] sm:$0xff]
      %v238 = vld [vmem:[%s210 + $0x48] sm:$0xff]
      %v239 = vld [vmem:[%s210 + $0x50] sm:$0xff]
      %v240 = vld [vmem:[%s210 + $0x58] sm:$0xff]
      %v241 = vld [vmem:[%s210 + $0x60] sm:$0xff]
      %v242 = vld [vmem:[%s210 + $0x68] sm:$0xff]
      %v243 = vld [vmem:[%s210 + $0x70] sm:$0xff]
      %v244 = vld [vmem:[%s210 + $0x78] sm:$0xff]
      %v245 = vld [vmem:[%s210 + $0x80] sm:$0xff]
      %v246 = vld [vmem:[%s210 + $0x88] sm:$0xff]
      %v247 = vld [vmem:[%s210 + $0x90] sm:$0xff]
      %v248 = vld [vmem:[%s210 + $0x98] sm:$0xff]
      %v249 = vld [vmem:[%s210 + $0xa0] sm:$0xff]
      %v250 = vld [vmem:[%s210 + $0xa8] sm:$0xff]
      %v251 = vld [vmem:[%s210 + $0xb0] sm:$0xff]
      %v252 = vld [vmem:[%s210 + $0xb8] sm:$0xff]
      %v253 = vld [vmem:[%s210 + $0xc0] sm:$0xff]
      %v254 = vld [vmem:[%s210 + $0xc8] sm:$0xff]
      %v255 = vld [vmem:[%s210 + $0xd0] sm:$0xff]
      %v256 = vld [vmem:[%s210 + $0xd8] sm:$0xff]
      %v257 = vld [vmem:[%s210 + $0xe0] sm:$0xff]
      %v258 = vld [vmem:[%s210 + $0xe8] sm:$0xff]
      %v259 = vld [vmem:[%s210 + $0xf0] sm:$0xff]
      %v260 = vld [vmem:[%s210 + $0xf8] sm:$0xff]
      %v261 = vld [vmem:[%s210 + $0x100] sm:$0xff]
      %v262 = vld [vmem:[%s210 + $0x108] sm:$0xff]
      %v263 = vld [vmem:[%s210 + $0x110] sm:$0xff]
      %v264 = vld [vmem:[%s210 + $0x118] sm:$0xff]
      %v265 = vld [vmem:[%s210 + $0x120] sm:$0xff]
      %v266 = vld [vmem:[%s210 + $0x128] sm:$0xff]
      %v267 = vld [vmem:[%s210 + $0x130] sm:$0xff]
      %v268 = vld [vmem:[%s210 + $0x138] sm:$0xff]
      %v269 = vld [vmem:[%s210 + $0x140] sm:$0xff]
      %v270 = vld [vmem:[%s210 + $0x148] sm:$0xff]
      %v271 = vld [vmem:[%s210 + $0x150] sm:$0xff]
      %v272 = vld [vmem:[%s210 + $0x158] sm:$0xff]
      %v273 = vld [vmem:[%s210 + $0x160] sm:$0xff]
      %v274 = vld [vmem:[%s210 + $0x168] sm:$0xff]
      %v275 = vld [vmem:[%s210 + $0x170] sm:$0xff]
      %v276 = vld [vmem:[%s210 + $0x178] sm:$0xff]
      %v277 = vld [vmem:[%s210 + $0x180] sm:$0xff]
      %v278 = vld [vmem:[%s210 + $0x188] sm:$0xff]
      %v279 = vld [vmem:[%s210 + $0x190] sm:$0xff]
      %v280 = vld [vmem:[%s210 + $0x198] sm:$0xff]
      %v281 = vld [vmem:[%s210 + $0x1a0] sm:$0xff]
      %v282 = vld [vmem:[%s210 + $0x1a8] sm:$0xff]
      %v283 = vld [vmem:[%s210 + $0x1b0] sm:$0xff]
      %v284 = vld [vmem:[%s210 + $0x1b8] sm:$0xff]
      %v285 = vld [vmem:[%s210 + $0x1c0] sm:$0xff]
      %v286 = vld [vmem:[%s210 + $0x1c8] sm:$0xff]
      %v287 = vld [vmem:[%s210 + $0x1d0] sm:$0xff]
      %v288 = vld [vmem:[%s210 + $0x1d8] sm:$0xff]
      %v289 = vld [vmem:[%s210 + $0x1e0] sm:$0xff]
      %v290 = vld [vmem:[%s210 + $0x1e8] sm:$0xff]
      %v291 = vld [vmem:[%s210 + $0x1f0] sm:$0xff]
      %v292 = vld [vmem:[%s210 + $0x1f8] sm:$0xff]
      %v293 = vld [vmem:[%s210 + $0x200] sm:$0xff]
      %v294 = vld [vmem:[%s210 + $0x208] sm:$0xff]
      %v295 = vld [vmem:[%s210 + $0x210] sm:$0xff]
      %v296 = vld [vmem:[%s210 + $0x218] sm:$0xff]
      %v297 = vld [vmem:[%s210 + $0x220] sm:$0xff]
      %v298 = vld [vmem:[%s210 + $0x228] sm:$0xff]
      %v299 = vld [vmem:[%s210 + $0x230] sm:$0xff]
      %v300 = vld [vmem:[%s210 + $0x238] sm:$0xff]
      %v301 = vld [vmem:[%s210 + $0x240] sm:$0xff]
      %v302 = vld [vmem:[%s210 + $0x248] sm:$0xff]
      %v303 = vld [vmem:[%s210 + $0x250] sm:$0xff]
      %v304 = vld [vmem:[%s210 + $0x258] sm:$0xff]
      %v305 = vld [vmem:[%s210 + $0x260] sm:$0xff]
      %v306 = vld [vmem:[%s210 + $0x268] sm:$0xff]
      %v307 = vld [vmem:[%s210 + $0x270] sm:$0xff]
      %v308 = vld [vmem:[%s210 + $0x278] sm:$0xff]
      %v309 = vld [vmem:[%s210 + $0x280] sm:$0xff]
      %v310 = vld [vmem:[%s210 + $0x288] sm:$0xff]
      %v311 = vld [vmem:[%s210 + $0x290] sm:$0xff]
      %v312 = vld [vmem:[%s210 + $0x298] sm:$0xff]
      %v313 = vld [vmem:[%s210 + $0x2a0] sm:$0xff]
      %v314 = vld [vmem:[%s210 + $0x2a8] sm:$0xff]
      %v315 = vld [vmem:[%s210 + $0x2b0] sm:$0xff]
      %v316 = vld [vmem:[%s210 + $0x2b8] sm:$0xff]
      %v317 = vld [vmem:[%s210 + $0x2c0] sm:$0xff]
      %v318 = vld [vmem:[%s210 + $0x2c8] sm:$0xff]
      %v319 = vld [vmem:[%s210 + $0x2d0] sm:$0xff]
      %v320 = vld [vmem:[%s210 + $0x2d8] sm:$0xff]
      %v321 = vld [vmem:[%s210 + $0x2e0] sm:$0xff]
      %v322 = vld [vmem:[%s210 + $0x2e8] sm:$0xff]
      %v323 = vld [vmem:[%s210 + $0x2f0] sm:$0xff]
      %v324 = vld [vmem:[%s210 + $0x2f8] sm:$0xff]
      %v325 = vld [vmem:[%s210 + $0x300] sm:$0xff]
      %v326 = vld [vmem:[%s210 + $0x308] sm:$0xff]
      %v327 = vld [vmem:[%s210 + $0x310] sm:$0xff]
      %v328 = vld [vmem:[%s210 + $0x318] sm:$0xff]
      %v329 = vld [vmem:[%s210 + $0x320] sm:$0xff]
      %v330 = vld [vmem:[%s210 + $0x328] sm:$0xff]
      %v331 = vld [vmem:[%s210 + $0x330] sm:$0xff]
      %v332 = vld [vmem:[%s210 + $0x338] sm:$0xff]
      %v333 = vld [vmem:[%s210 + $0x340] sm:$0xff]
      %v334 = vld [vmem:[%s210 + $0x348] sm:$0xff]
      %v335 = vld [vmem:[%s210 + $0x350] sm:$0xff]
      %v336 = vld [vmem:[%s210 + $0x358] sm:$0xff]
      %v337 = vld [vmem:[%s210 + $0x360] sm:$0xff]
      %v338 = vld [vmem:[%s210 + $0x368] sm:$0xff]
      %v339 = vld [vmem:[%s210 + $0x370] sm:$0xff]
      %v340 = vld [vmem:[%s210 + $0x378] sm:$0xff]
      %v341 = vld [vmem:[%s210 + $0x380] sm:$0xff]
      %v342 = vld [vmem:[%s210 + $0x388] sm:$0xff]
      %v343 = vld [vmem:[%s210 + $0x390] sm:$0xff]
      %v344 = vld [vmem:[%s210 + $0x398] sm:$0xff]
      %v345 = vld [vmem:[%s210 + $0x3a0] sm:$0xff]
      %v346 = vld [vmem:[%s210 + $0x3a8] sm:$0xff]
      %v347 = vld [vmem:[%s210 + $0x3b0] sm:$0xff]
      %v348 = vld [vmem:[%s210 + $0x3b8] sm:$0xff]
      %v349 = vld [vmem:[%s210 + $0x3c0] sm:$0xff]
      %v350 = vld [vmem:[%s210 + $0x3c8] sm:$0xff]
      %v351 = vld [vmem:[%s210 + $0x3d0] sm:$0xff]
      %v352 = vld [vmem:[%s210 + $0x3d8] sm:$0xff]
      %v353 = vld [vmem:[%s210 + $0x3e0] sm:$0xff]
      %v354 = vld [vmem:[%s210 + $0x3e8] sm:$0xff]
      %v355 = vld [vmem:[%s210 + $0x3f0] sm:$0xff]
      %v356 = vld [vmem:[%s210 + $0x3f8] sm:$0xff]
      %v357 = vld [vmem:[%s215] sm:$0xf]
      %v358 = vld [vmem:[%s215 + $0x4] sm:$0xf]
      %v359 = vld [vmem:[%s215 + $0x8] sm:$0xf]
      %v360 = vld [vmem:[%s215 + $0xc] sm:$0xf]
      %v361 = vld [vmem:[%s215 + $0x10] sm:$0xf]
      %v362 = vld [vmem:[%s215 + $0x14] sm:$0xf]
      %v363 = vld [vmem:[%s215 + $0x18] sm:$0xf]
      %v364 = vld [vmem:[%s215 + $0x1c] sm:$0xf]
      %v365 = vld [vmem:[%s215 + $0x20] sm:$0xf]
      %v366 = vld [vmem:[%s215 + $0x24] sm:$0xf]
      %v367 = vld [vmem:[%s215 + $0x28] sm:$0xf]
      %v368 = vld [vmem:[%s215 + $0x2c] sm:$0xf]
      %v369 = vld [vmem:[%s215 + $0x30] sm:$0xf]
      %v370 = vld [vmem:[%s215 + $0x34] sm:$0xf]
      %v371 = vld [vmem:[%s215 + $0x38] sm:$0xf]
      %v372 = vld [vmem:[%s215 + $0x3c] sm:$0xf]
      %v373 = vld [vmem:[%s215 + $0x40] sm:$0xf]
      %v374 = vld [vmem:[%s215 + $0x44] sm:$0xf]
      %v375 = vld [vmem:[%s215 + $0x48] sm:$0xf]
      %v376 = vld [vmem:[%s215 + $0x4c] sm:$0xf]
      %v377 = vld [vmem:[%s215 + $0x50] sm:$0xf]
      %v378 = vld [vmem:[%s215 + $0x54] sm:$0xf]
      %v379 = vld [vmem:[%s215 + $0x58] sm:$0xf]
      %v380 = vld [vmem:[%s215 + $0x5c] sm:$0xf]
      %v381 = vld [vmem:[%s215 + $0x60] sm:$0xf]
      %v382 = vld [vmem:[%s215 + $0x64] sm:$0xf]
      %v383 = vld [vmem:[%s215 + $0x68] sm:$0xf]
      %v384 = vld [vmem:[%s215 + $0x6c] sm:$0xf]
      %v385 = vld [vmem:[%s215 + $0x70] sm:$0xf]
      %v386 = vld [vmem:[%s215 + $0x74] sm:$0xf]
      %v387 = vld [vmem:[%s215 + $0x78] sm:$0xf]
      %v388 = vld [vmem:[%s215 + $0x7c] sm:$0xf]
      %v389 = vld [vmem:[%s215 + $0x80] sm:$0xf]
      %v390 = vld [vmem:[%s215 + $0x84] sm:$0xf]
      %v391 = vld [vmem:[%s215 + $0x88] sm:$0xf]
      %v392 = vld [vmem:[%s215 + $0x8c] sm:$0xf]
      %v393 = vld [vmem:[%s215 + $0x90] sm:$0xf]
      %v394 = vld [vmem:[%s215 + $0x94] sm:$0xf]
      %v395 = vld [vmem:[%s215 + $0x98] sm:$0xf]
      %v396 = vld [vmem:[%s215 + $0x9c] sm:$0xf]
      %v397 = vld [vmem:[%s215 + $0xa0] sm:$0xf]
      %v398 = vld [vmem:[%s215 + $0xa4] sm:$0xf]
      %v399 = vld [vmem:[%s215 + $0xa8] sm:$0xf]
      %v400 = vld [vmem:[%s215 + $0xac] sm:$0xf]
      %v401 = vld [vmem:[%s215 + $0xb0] sm:$0xf]
      %v402 = vld [vmem:[%s215 + $0xb4] sm:$0xf]
      %v403 = vld [vmem:[%s215 + $0xb8] sm:$0xf]
      %v404 = vld [vmem:[%s215 + $0xbc] sm:$0xf]
      %v405 = vld [vmem:[%s215 + $0xc0] sm:$0xf]
      %v406 = vld [vmem:[%s218] sm:$0x1]
      %v408 = vlaneseq
      %v409 = vshrl.u32 %v408, 7
      %v410 = vsub.s32 0, %v409
      %v411 = vrot.slane %v406, %v410
      %v541 = vunpack.c.l.b16 %v229
      %v542 = vunpack.c.h.b16 %v229
      %v543 = vunpack.c.l.b16 %v230
      %v544 = vunpack.c.h.b16 %v230
      %v545 = vunpack.c.l.b16 %v231
      %v546 = vunpack.c.h.b16 %v231
      %v547 = vunpack.c.l.b16 %v232
      %v548 = vunpack.c.h.b16 %v232
      %v549 = vunpack.c.l.b16 %v233
      %v550 = vunpack.c.h.b16 %v233
      %v551 = vunpack.c.l.b16 %v234
      %v552 = vunpack.c.h.b16 %v234
      %v553 = vunpack.c.l.b16 %v235
      %v554 = vunpack.c.h.b16 %v235
      %v555 = vunpack.c.l.b16 %v236
      %v556 = vunpack.c.h.b16 %v236
      %v557 = vunpack.c.l.b16 %v237
      %v558 = vunpack.c.h.b16 %v237
      %v559 = vunpack.c.l.b16 %v238
      %v560 = vunpack.c.h.b16 %v238
      %v561 = vunpack.c.l.b16 %v239
      %v562 = vunpack.c.h.b16 %v239
      %v563 = vunpack.c.l.b16 %v240
      %v564 = vunpack.c.h.b16 %v240
      %v565 = vunpack.c.l.b16 %v241
      %v566 = vunpack.c.h.b16 %v241
      %v567 = vunpack.c.l.b16 %v242
      %v568 = vunpack.c.h.b16 %v242
      %v569 = vunpack.c.l.b16 %v243
      %v570 = vunpack.c.h.b16 %v243
      %v571 = vunpack.c.l.b16 %v244
      %v572 = vunpack.c.h.b16 %v244
      %v573 = vunpack.c.l.b16 %v245
      %v574 = vunpack.c.h.b16 %v245
      %v575 = vunpack.c.l.b16 %v246
      %v576 = vunpack.c.h.b16 %v246
      %v577 = vunpack.c.l.b16 %v247
      %v578 = vunpack.c.h.b16 %v247
      %v579 = vunpack.c.l.b16 %v248
      %v580 = vunpack.c.h.b16 %v248
      %v581 = vunpack.c.l.b16 %v249
      %v582 = vunpack.c.h.b16 %v249
      %v583 = vunpack.c.l.b16 %v250
      %v584 = vunpack.c.h.b16 %v250
      %v585 = vunpack.c.l.b16 %v251
      %v586 = vunpack.c.h.b16 %v251
      %v587 = vunpack.c.l.b16 %v252
      %v588 = vunpack.c.h.b16 %v252
      %v589 = vunpack.c.l.b16 %v253
      %v590 = vunpack.c.h.b16 %v253
      %v591 = vunpack.c.l.b16 %v254
      %v592 = vunpack.c.h.b16 %v254
      %v593 = vunpack.c.l.b16 %v255
      %v594 = vunpack.c.h.b16 %v255
      %v595 = vunpack.c.l.b16 %v256
      %v596 = vunpack.c.h.b16 %v256
      %v597 = vunpack.c.l.b16 %v257
      %v598 = vunpack.c.h.b16 %v257
      %v599 = vunpack.c.l.b16 %v258
      %v600 = vunpack.c.h.b16 %v258
      %v601 = vunpack.c.l.b16 %v259
      %v602 = vunpack.c.h.b16 %v259
      %v603 = vunpack.c.l.b16 %v260
      %v604 = vunpack.c.h.b16 %v260
      %v605 = vunpack.c.l.b16 %v261
      %v606 = vunpack.c.h.b16 %v261
      %v607 = vunpack.c.l.b16 %v262
      %v608 = vunpack.c.h.b16 %v262
      %v609 = vunpack.c.l.b16 %v263
      %v610 = vunpack.c.h.b16 %v263
      %v611 = vunpack.c.l.b16 %v264
      %v612 = vunpack.c.h.b16 %v264
      %v613 = vunpack.c.l.b16 %v265
      %v614 = vunpack.c.h.b16 %v265
      %v615 = vunpack.c.l.b16 %v266
      %v616 = vunpack.c.h.b16 %v266
      %v617 = vunpack.c.l.b16 %v267
      %v618 = vunpack.c.h.b16 %v267
      %v619 = vunpack.c.l.b16 %v268
      %v620 = vunpack.c.h.b16 %v268
      %v621 = vunpack.c.l.b16 %v269
      %v622 = vunpack.c.h.b16 %v269
      %v623 = vunpack.c.l.b16 %v270
      %v624 = vunpack.c.h.b16 %v270
      %v625 = vunpack.c.l.b16 %v271
      %v626 = vunpack.c.h.b16 %v271
      %v627 = vunpack.c.l.b16 %v272
      %v628 = vunpack.c.h.b16 %v272
      %v629 = vunpack.c.l.b16 %v273
      %v630 = vunpack.c.h.b16 %v273
      %v631 = vunpack.c.l.b16 %v274
      %v632 = vunpack.c.h.b16 %v274
      %v633 = vunpack.c.l.b16 %v275
      %v634 = vunpack.c.h.b16 %v275
      %v635 = vunpack.c.l.b16 %v276
      %v636 = vunpack.c.h.b16 %v276
      %v637 = vunpack.c.l.b16 %v277
      %v638 = vunpack.c.h.b16 %v277
      %v639 = vunpack.c.l.b16 %v278
      %v640 = vunpack.c.h.b16 %v278
      %v641 = vunpack.c.l.b16 %v279
      %v642 = vunpack.c.h.b16 %v279
      %v643 = vunpack.c.l.b16 %v280
      %v644 = vunpack.c.h.b16 %v280
      %v645 = vunpack.c.l.b16 %v281
      %v646 = vunpack.c.h.b16 %v281
      %v647 = vunpack.c.l.b16 %v282
      %v648 = vunpack.c.h.b16 %v282
      %v649 = vunpack.c.l.b16 %v283
      %v650 = vunpack.c.h.b16 %v283
      %v651 = vunpack.c.l.b16 %v284
      %v652 = vunpack.c.h.b16 %v284
      %v653 = vunpack.c.l.b16 %v285
      %v654 = vunpack.c.h.b16 %v285
      %v655 = vunpack.c.l.b16 %v286
      %v656 = vunpack.c.h.b16 %v286
      %v657 = vunpack.c.l.b16 %v287
      %v658 = vunpack.c.h.b16 %v287
      %v659 = vunpack.c.l.b16 %v288
      %v660 = vunpack.c.h.b16 %v288
      %v661 = vunpack.c.l.b16 %v289
      %v662 = vunpack.c.h.b16 %v289
      %v663 = vunpack.c.l.b16 %v290
      %v664 = vunpack.c.h.b16 %v290
      %v665 = vunpack.c.l.b16 %v291
      %v666 = vunpack.c.h.b16 %v291
      %v667 = vunpack.c.l.b16 %v292
      %v668 = vunpack.c.h.b16 %v292
      %v669 = vunpack.c.l.b16 %v293
      %v670 = vunpack.c.h.b16 %v293
      %v671 = vunpack.c.l.b16 %v294
      %v672 = vunpack.c.h.b16 %v294
      %v673 = vunpack.c.l.b16 %v295
      %v674 = vunpack.c.h.b16 %v295
      %v675 = vunpack.c.l.b16 %v296
      %v676 = vunpack.c.h.b16 %v296
      %v677 = vunpack.c.l.b16 %v297
      %v678 = vunpack.c.h.b16 %v297
      %v679 = vunpack.c.l.b16 %v298
      %v680 = vunpack.c.h.b16 %v298
      %v681 = vunpack.c.l.b16 %v299
      %v682 = vunpack.c.h.b16 %v299
      %v683 = vunpack.c.l.b16 %v300
      %v684 = vunpack.c.h.b16 %v300
      %v685 = vunpack.c.l.b16 %v301
      %v686 = vunpack.c.h.b16 %v301
      %v687 = vunpack.c.l.b16 %v302
      %v688 = vunpack.c.h.b16 %v302
      %v689 = vunpack.c.l.b16 %v303
      %v690 = vunpack.c.h.b16 %v303
      %v691 = vunpack.c.l.b16 %v304
      %v692 = vunpack.c.h.b16 %v304
      %v693 = vunpack.c.l.b16 %v305
      %v694 = vunpack.c.h.b16 %v305
      %v695 = vunpack.c.l.b16 %v306
      %v696 = vunpack.c.h.b16 %v306
      %v697 = vunpack.c.l.b16 %v307
      %v698 = vunpack.c.h.b16 %v307
      %v699 = vunpack.c.l.b16 %v308
      %v700 = vunpack.c.h.b16 %v308
      %v701 = vunpack.c.l.b16 %v309
      %v702 = vunpack.c.h.b16 %v309
      %v703 = vunpack.c.l.b16 %v310
      %v704 = vunpack.c.h.b16 %v310
      %v705 = vunpack.c.l.b16 %v311
      %v706 = vunpack.c.h.b16 %v311
      %v707 = vunpack.c.l.b16 %v312
      %v708 = vunpack.c.h.b16 %v312
      %v709 = vunpack.c.l.b16 %v313
      %v710 = vunpack.c.h.b16 %v313
      %v711 = vunpack.c.l.b16 %v314
      %v712 = vunpack.c.h.b16 %v314
      %v713 = vunpack.c.l.b16 %v315
      %v714 = vunpack.c.h.b16 %v315
      %v715 = vunpack.c.l.b16 %v316
      %v716 = vunpack.c.h.b16 %v316
      %v717 = vunpack.c.l.b16 %v317
      %v718 = vunpack.c.h.b16 %v317
      %v719 = vunpack.c.l.b16 %v318
      %v720 = vunpack.c.h.b16 %v318
      %v721 = vunpack.c.l.b16 %v319
      %v722 = vunpack.c.h.b16 %v319
      %v723 = vunpack.c.l.b16 %v320
      %v724 = vunpack.c.h.b16 %v320
      %v725 = vunpack.c.l.b16 %v321
      %v726 = vunpack.c.h.b16 %v321
      %v727 = vunpack.c.l.b16 %v322
      %v728 = vunpack.c.h.b16 %v322
      %v729 = vunpack.c.l.b16 %v323
      %v730 = vunpack.c.h.b16 %v323
      %v731 = vunpack.c.l.b16 %v324
      %v732 = vunpack.c.h.b16 %v324
      %v733 = vunpack.c.l.b16 %v325
      %v734 = vunpack.c.h.b16 %v325
      %v735 = vunpack.c.l.b16 %v326
      %v736 = vunpack.c.h.b16 %v326
      %v737 = vunpack.c.l.b16 %v327
      %v738 = vunpack.c.h.b16 %v327
      %v739 = vunpack.c.l.b16 %v328
      %v740 = vunpack.c.h.b16 %v328
      %v741 = vunpack.c.l.b16 %v329
      %v742 = vunpack.c.h.b16 %v329
      %v743 = vunpack.c.l.b16 %v330
      %v744 = vunpack.c.h.b16 %v330
      %v745 = vunpack.c.l.b16 %v331
      %v746 = vunpack.c.h.b16 %v331
      %v747 = vunpack.c.l.b16 %v332
      %v748 = vunpack.c.h.b16 %v332
      %v749 = vunpack.c.l.b16 %v333
      %v750 = vunpack.c.h.b16 %v333
      %v751 = vunpack.c.l.b16 %v334
      %v752 = vunpack.c.h.b16 %v334
      %v753 = vunpack.c.l.b16 %v335
      %v754 = vunpack.c.h.b16 %v335
      %v755 = vunpack.c.l.b16 %v336
      %v756 = vunpack.c.h.b16 %v336
      %v757 = vunpack.c.l.b16 %v337
      %v758 = vunpack.c.h.b16 %v337
      %v759 = vunpack.c.l.b16 %v338
      %v760 = vunpack.c.h.b16 %v338
      %v761 = vunpack.c.l.b16 %v339
      %v762 = vunpack.c.h.b16 %v339
      %v763 = vunpack.c.l.b16 %v340
      %v764 = vunpack.c.h.b16 %v340
      %v765 = vunpack.c.l.b16 %v341
      %v766 = vunpack.c.h.b16 %v341
      %v767 = vunpack.c.l.b16 %v342
      %v768 = vunpack.c.h.b16 %v342
      %v769 = vunpack.c.l.b16 %v343
      %v770 = vunpack.c.h.b16 %v343
      %v771 = vunpack.c.l.b16 %v344
      %v772 = vunpack.c.h.b16 %v344
      %v773 = vunpack.c.l.b16 %v345
      %v774 = vunpack.c.h.b16 %v345
      %v775 = vunpack.c.l.b16 %v346
      %v776 = vunpack.c.h.b16 %v346
      %v777 = vunpack.c.l.b16 %v347
      %v778 = vunpack.c.h.b16 %v347
      %v779 = vunpack.c.l.b16 %v348
      %v780 = vunpack.c.h.b16 %v348
      %v781 = vunpack.c.l.b16 %v349
      %v782 = vunpack.c.h.b16 %v349
      %v783 = vunpack.c.l.b16 %v350
      %v784 = vunpack.c.h.b16 %v350
      %v785 = vunpack.c.l.b16 %v351
      %v786 = vunpack.c.h.b16 %v351
      %v787 = vunpack.c.l.b16 %v352
      %v788 = vunpack.c.h.b16 %v352
      %v789 = vunpack.c.l.b16 %v353
      %v790 = vunpack.c.h.b16 %v353
      %v791 = vunpack.c.l.b16 %v354
      %v792 = vunpack.c.h.b16 %v354
      %v793 = vunpack.c.l.b16 %v355
      %v794 = vunpack.c.h.b16 %v355
      %v795 = vunpack.c.l.b16 %v356
      %v796 = vunpack.c.h.b16 %v356
      %v797 = vpack.c.b16 %v545, %v541
      %v798 = vpack.c.b16 %v546, %v542
      %v799 = vpack.c.b16 %v547, %v543
      %v800 = vpack.c.b16 %v548, %v544
      %v801 = vpack.c.b16 %v553, %v549
      %v802 = vpack.c.b16 %v554, %v550
      %v803 = vpack.c.b16 %v555, %v551
      %v804 = vpack.c.b16 %v556, %v552
      %v805 = vpack.c.b16 %v561, %v557
      %v806 = vpack.c.b16 %v562, %v558
      %v807 = vpack.c.b16 %v563, %v559
      %v808 = vpack.c.b16 %v564, %v560
      %v809 = vpack.c.b16 %v569, %v565
      %v810 = vpack.c.b16 %v570, %v566
      %v811 = vpack.c.b16 %v571, %v567
      %v812 = vpack.c.b16 %v572, %v568
      %v813 = vpack.c.b16 %v577, %v573
      %v814 = vpack.c.b16 %v578, %v574
      %v815 = vpack.c.b16 %v579, %v575
      %v816 = vpack.c.b16 %v580, %v576
      %v817 = vpack.c.b16 %v585, %v581
      %v818 = vpack.c.b16 %v586, %v582
      %v819 = vpack.c.b16 %v587, %v583
      %v820 = vpack.c.b16 %v588, %v584
      %v821 = vpack.c.b16 %v593, %v589
      %v822 = vpack.c.b16 %v594, %v590
      %v823 = vpack.c.b16 %v595, %v591
      %v824 = vpack.c.b16 %v596, %v592
      %v825 = vpack.c.b16 %v601, %v597
      %v826 = vpack.c.b16 %v602, %v598
      %v827 = vpack.c.b16 %v603, %v599
      %v828 = vpack.c.b16 %v604, %v600
      %v829 = vpack.c.b16 %v609, %v605
      %v830 = vpack.c.b16 %v610, %v606
      %v831 = vpack.c.b16 %v611, %v607
      %v832 = vpack.c.b16 %v612, %v608
      %v833 = vpack.c.b16 %v617, %v613
      %v834 = vpack.c.b16 %v618, %v614
      %v835 = vpack.c.b16 %v619, %v615
      %v836 = vpack.c.b16 %v620, %v616
      %v837 = vpack.c.b16 %v625, %v621
      %v838 = vpack.c.b16 %v626, %v622
      %v839 = vpack.c.b16 %v627, %v623
      %v840 = vpack.c.b16 %v628, %v624
      %v841 = vpack.c.b16 %v633, %v629
      %v842 = vpack.c.b16 %v634, %v630
      %v843 = vpack.c.b16 %v635, %v631
      %v844 = vpack.c.b16 %v636, %v632
      %v845 = vpack.c.b16 %v641, %v637
      %v846 = vpack.c.b16 %v642, %v638
      %v847 = vpack.c.b16 %v643, %v639
      %v848 = vpack.c.b16 %v644, %v640
      %v849 = vpack.c.b16 %v649, %v645
      %v850 = vpack.c.b16 %v650, %v646
      %v851 = vpack.c.b16 %v651, %v647
      %v852 = vpack.c.b16 %v652, %v648
      %v853 = vpack.c.b16 %v657, %v653
      %v854 = vpack.c.b16 %v658, %v654
      %v855 = vpack.c.b16 %v659, %v655
      %v856 = vpack.c.b16 %v660, %v656
      %v857 = vpack.c.b16 %v665, %v661
      %v858 = vpack.c.b16 %v666, %v662
      %v859 = vpack.c.b16 %v667, %v663
      %v860 = vpack.c.b16 %v668, %v664
      %v861 = vpack.c.b16 %v673, %v669
      %v862 = vpack.c.b16 %v674, %v670
      %v863 = vpack.c.b16 %v675, %v671
      %v864 = vpack.c.b16 %v676, %v672
      %v865 = vpack.c.b16 %v681, %v677
      %v866 = vpack.c.b16 %v682, %v678
      %v867 = vpack.c.b16 %v683, %v679
      %v868 = vpack.c.b16 %v684, %v680
      %v869 = vpack.c.b16 %v689, %v685
      %v870 = vpack.c.b16 %v690, %v686
      %v871 = vpack.c.b16 %v691, %v687
      %v872 = vpack.c.b16 %v692, %v688
      %v873 = vpack.c.b16 %v697, %v693
      %v874 = vpack.c.b16 %v698, %v694
      %v875 = vpack.c.b16 %v699, %v695
      %v876 = vpack.c.b16 %v700, %v696
      %v877 = vpack.c.b16 %v705, %v701
      %v878 = vpack.c.b16 %v706, %v702
      %v879 = vpack.c.b16 %v707, %v703
      %v880 = vpack.c.b16 %v708, %v704
      %v881 = vpack.c.b16 %v713, %v709
      %v882 = vpack.c.b16 %v714, %v710
      %v883 = vpack.c.b16 %v715, %v711
      %v884 = vpack.c.b16 %v716, %v712
      %v885 = vpack.c.b16 %v721, %v717
      %v886 = vpack.c.b16 %v722, %v718
      %v887 = vpack.c.b16 %v723, %v719
      %v888 = vpack.c.b16 %v724, %v720
      %v889 = vpack.c.b16 %v729, %v725
      %v890 = vpack.c.b16 %v730, %v726
      %v891 = vpack.c.b16 %v731, %v727
      %v892 = vpack.c.b16 %v732, %v728
      %v893 = vpack.c.b16 %v737, %v733
      %v894 = vpack.c.b16 %v738, %v734
      %v895 = vpack.c.b16 %v739, %v735
      %v896 = vpack.c.b16 %v740, %v736
      %v897 = vpack.c.b16 %v745, %v741
      %v898 = vpack.c.b16 %v746, %v742
      %v899 = vpack.c.b16 %v747, %v743
      %v900 = vpack.c.b16 %v748, %v744
      %v901 = vpack.c.b16 %v753, %v749
      %v902 = vpack.c.b16 %v754, %v750
      %v903 = vpack.c.b16 %v755, %v751
      %v904 = vpack.c.b16 %v756, %v752
      %v905 = vpack.c.b16 %v761, %v757
      %v906 = vpack.c.b16 %v762, %v758
      %v907 = vpack.c.b16 %v763, %v759
      %v908 = vpack.c.b16 %v764, %v760
      %v909 = vpack.c.b16 %v769, %v765
      %v910 = vpack.c.b16 %v770, %v766
      %v911 = vpack.c.b16 %v771, %v767
      %v912 = vpack.c.b16 %v772, %v768
      %v913 = vpack.c.b16 %v777, %v773
      %v914 = vpack.c.b16 %v778, %v774
      %v915 = vpack.c.b16 %v779, %v775
      %v916 = vpack.c.b16 %v780, %v776
      %v917 = vpack.c.b16 %v785, %v781
      %v918 = vpack.c.b16 %v786, %v782
      %v919 = vpack.c.b16 %v787, %v783
      %v920 = vpack.c.b16 %v788, %v784
      %v921 = vpack.c.b16 %v793, %v789
      %v922 = vpack.c.b16 %v794, %v790
      %v923 = vpack.c.b16 %v795, %v791
      %v924 = vpack.c.b16 %v796, %v792
      %v1070 = vunpack.c.l.b16 %v357
      %v1071 = vunpack.c.l.b16 %v358
      %v1072 = vunpack.c.l.b16 %v359
      %v1073 = vunpack.c.l.b16 %v360
      %v1074 = vunpack.c.l.b16 %v361
      %v1075 = vunpack.c.l.b16 %v362
      %v1076 = vunpack.c.l.b16 %v363
      %v1077 = vunpack.c.l.b16 %v364
      %v1078 = vunpack.c.l.b16 %v365
      %v1079 = vunpack.c.l.b16 %v366
      %v1080 = vunpack.c.l.b16 %v367
      %v1081 = vunpack.c.l.b16 %v368
      %v1082 = vunpack.c.l.b16 %v369
      %v1083 = vunpack.c.l.b16 %v370
      %v1084 = vunpack.c.l.b16 %v371
      %v1085 = vunpack.c.l.b16 %v372
      %v1086 = vunpack.c.l.b16 %v373
      %v1087 = vunpack.c.l.b16 %v374
      %v1088 = vunpack.c.l.b16 %v375
      %v1089 = vunpack.c.l.b16 %v376
      %v1090 = vunpack.c.l.b16 %v377
      %v1091 = vunpack.c.l.b16 %v378
      %v1092 = vunpack.c.l.b16 %v379
      %v1093 = vunpack.c.l.b16 %v380
      %v1094 = vunpack.c.l.b16 %v381
      %v1095 = vunpack.c.l.b16 %v382
      %v1096 = vunpack.c.l.b16 %v383
      %v1097 = vunpack.c.l.b16 %v384
      %v1098 = vunpack.c.l.b16 %v385
      %v1099 = vunpack.c.l.b16 %v386
      %v1100 = vunpack.c.l.b16 %v387
      %v1101 = vunpack.c.l.b16 %v388
      %v1102 = vunpack.c.l.b16 %v389
      %v1103 = vunpack.c.l.b16 %v390
      %v1104 = vunpack.c.l.b16 %v391
      %v1105 = vunpack.c.l.b16 %v392
      %v1106 = vunpack.c.l.b16 %v393
      %v1107 = vunpack.c.l.b16 %v394
      %v1108 = vunpack.c.l.b16 %v395
      %v1109 = vunpack.c.l.b16 %v396
      %v1110 = vunpack.c.l.b16 %v397
      %v1111 = vunpack.c.l.b16 %v398
      %v1112 = vunpack.c.l.b16 %v399
      %v1113 = vunpack.c.l.b16 %v400
      %v1114 = vunpack.c.l.b16 %v401
      %v1115 = vunpack.c.l.b16 %v402
      %v1116 = vunpack.c.l.b16 %v403
      %v1117 = vunpack.c.l.b16 %v404
      %v1118 = vunpack.c.l.b16 %v405
      %v1119 = vpack.c.b16 %v1071, %v1070
      %v1120 = vpack.c.b16 %v1073, %v1072
      %v1121 = vpack.c.b16 %v1075, %v1074
      %v1122 = vpack.c.b16 %v1077, %v1076
      %v1123 = vpack.c.b16 %v1079, %v1078
      %v1124 = vpack.c.b16 %v1081, %v1080
      %v1125 = vpack.c.b16 %v1083, %v1082
      %v1126 = vpack.c.b16 %v1085, %v1084
      %v1127 = vpack.c.b16 %v1087, %v1086
      %v1128 = vpack.c.b16 %v1089, %v1088
      %v1129 = vpack.c.b16 %v1091, %v1090
      %v1130 = vpack.c.b16 %v1093, %v1092
      %v1131 = vpack.c.b16 %v1095, %v1094
      %v1132 = vpack.c.b16 %v1097, %v1096
      %v1133 = vpack.c.b16 %v1099, %v1098
      %v1134 = vpack.c.b16 %v1101, %v1100
      %v1135 = vpack.c.b16 %v1103, %v1102
      %v1136 = vpack.c.b16 %v1105, %v1104
      %v1137 = vpack.c.b16 %v1107, %v1106
      %v1138 = vpack.c.b16 %v1109, %v1108
      %v1139 = vpack.c.b16 %v1111, %v1110
      %v1140 = vpack.c.b16 %v1113, %v1112
      %v1141 = vpack.c.b16 %v1115, %v1114
      %v1142 = vpack.c.b16 %v1117, %v1116
      %v1143 = vpack.c.b16 %v1118, %v1118
      %vm1168 = vcmask 64512
      %v1170 = vsel %vm1168, %v800, 0
      %v1173 = vsel %vm1168, %v804, 0
      %v1176 = vsel %vm1168, %v808, 0
      %v1179 = vsel %vm1168, %v812, 0
      %v1182 = vsel %vm1168, %v816, 0
      %v1185 = vsel %vm1168, %v820, 0
      %v1188 = vsel %vm1168, %v824, 0
      %v1191 = vsel %vm1168, %v828, 0
      %v1194 = vsel %vm1168, %v832, 0
      %v1197 = vsel %vm1168, %v836, 0
      %v1200 = vsel %vm1168, %v840, 0
      %v1203 = vsel %vm1168, %v844, 0
      %v1206 = vsel %vm1168, %v848, 0
      %v1209 = vsel %vm1168, %v852, 0
      %v1212 = vsel %vm1168, %v856, 0
      %v1215 = vsel %vm1168, %v860, 0
      %v1218 = vsel %vm1168, %v864, 0
      %v1221 = vsel %vm1168, %v868, 0
      %v1224 = vsel %vm1168, %v872, 0
      %v1227 = vsel %vm1168, %v876, 0
      %v1230 = vsel %vm1168, %v880, 0
      %v1233 = vsel %vm1168, %v884, 0
      %v1236 = vsel %vm1168, %v888, 0
      %v1239 = vsel %vm1168, %v892, 0
      %v1242 = vsel %vm1168, %v896, 0
      %v1245 = vsel %vm1168, %v900, 0
      %v1248 = vsel %vm1168, %v904, 0
      %v1251 = vsel %vm1168, %v908, 0
      %v1254 = vsel %vm1168, %v912, 0
      %v1257 = vsel %vm1168, %v916, 0
      %v1260 = vsel %vm1168, %v920, 0
      %v1263 = vsel %vm1168, %v924, 0
      %vm1265 = vcmask 1043456
      %v1267 = vsel %vm1265, %v1143, 0
      %1269 = vmatprep.subr.bf16.mxu0 0
      %1270 = vmatpush1.bf16.msra.mxu0 %v1126
      %1271 = vmatprep.subr.bf16.mxu0 0
      %1272 = vmatpush1.bf16.msra.mxu0 %v1125
      %1273 = vmatprep.subr.bf16.mxu0 0
      %1274 = vmatpush1.bf16.msra.mxu0 %v1124
      %1275 = vmatprep.subr.bf16.mxu0 0
      %1276 = vmatpush1.bf16.msra.mxu0 %v1123
      %1277 = vmatprep.subr.bf16.mxu0 0
      %1278 = vmatpush1.bf16.msra.mxu0 %v1122
      %1279 = vmatprep.subr.bf16.mxu0 0
      %1280 = vmatpush1.bf16.msra.mxu0 %v1121
      %1281 = vmatprep.subr.bf16.mxu0 0
      %1282 = vmatpush1.bf16.msra.mxu0 %v1120
      %1283 = vmatprep.subr.bf16.mxu0 0
      %1284 = vmatpush1.bf16.msra.mxu0 %v1119
      %1285 = vmatprep.subr.bf16.mxu0 0
      %1286 = vmatpush2.bf16.msra.mxu0 %v1134
      %1287 = vmatprep.subr.bf16.mxu0 0
      %1288 = vmatpush2.bf16.msra.mxu0 %v1133
      %1289 = vmatprep.subr.bf16.mxu0 0
      %1290 = vmatpush2.bf16.msra.mxu0 %v1132
      %1291 = vmatprep.subr.bf16.mxu0 0
      %1292 = vmatpush2.bf16.msra.mxu0 %v1131
      %1293 = vmatprep.subr.bf16.mxu0 0
      %1294 = vmatpush2.bf16.msra.mxu0 %v1130
      %1295 = vmatprep.subr.bf16.mxu0 0
      %1296 = vmatpush2.bf16.msra.mxu0 %v1129
      %1297 = vmatprep.subr.bf16.mxu0 0
      %1298 = vmatpush2.bf16.msra.mxu0 %v1128
      %1299 = vmatprep.subr.bf16.mxu0 0
      %1300 = vmatpush2.bf16.msra.mxu0 %v1127
      %1301 = vmatprep.mubr.bf16.mxu0 %v798
      %1302 = vmatmul.mubr.bf16.gmra.mxu0 %v797
      %v1303 = vpop.f32.mrf.mxu0
      %v1304 = vadd.f32 %v411, %v1303
      %v1305 = vpop.f32.mrf.mxu0
      %v1306 = vpop.f32.mrf.mxu0
      %v1307 = vadd.f32 %v411, %v1306
      %v1308 = vpop.f32.mrf.mxu0
      %1309 = vmatprep.mubr.bf16.mxu0 %v802
      %1310 = vmatmul.mubr.bf16.gmra.mxu0 %v801
      %v1311 = vpop.f32.mrf.mxu0
      %v1312 = vadd.f32 %v411, %v1311
      %v1313 = vpop.f32.mrf.mxu0
      %v1314 = vpop.f32.mrf.mxu0
      %v1315 = vadd.f32 %v411, %v1314
      %v1316 = vpop.f32.mrf.mxu0
      %1317 = vmatprep.mubr.bf16.mxu0 %v806
      %1318 = vmatmul.mubr.bf16.gmra.mxu0 %v805
      %v1319 = vpop.f32.mrf.mxu0
      %v1320 = vadd.f32 %v411, %v1319
      %v1321 = vpop.f32.mrf.mxu0
      %v1322 = vpop.f32.mrf.mxu0
      %v1323 = vadd.f32 %v411, %v1322
      %v1324 = vpop.f32.mrf.mxu0
      %1325 = vmatprep.mubr.bf16.mxu0 %v810
      %1326 = vmatmul.mubr.bf16.gmra.mxu0 %v809
      %v1327 = vpop.f32.mrf.mxu0
      %v1328 = vadd.f32 %v411, %v1327
      %v1329 = vpop.f32.mrf.mxu0
      %v1330 = vpop.f32.mrf.mxu0
      %v1331 = vadd.f32 %v411, %v1330
      %v1332 = vpop.f32.mrf.mxu0
      %1333 = vmatprep.mubr.bf16.mxu0 %v814
      %1334 = vmatmul.mubr.bf16.gmra.mxu0 %v813
      %v1335 = vpop.f32.mrf.mxu0
      %v1336 = vadd.f32 %v411, %v1335
      %v1337 = vpop.f32.mrf.mxu0
      %v1338 = vpop.f32.mrf.mxu0
      %v1339 = vadd.f32 %v411, %v1338
      %v1340 = vpop.f32.mrf.mxu0
      %1341 = vmatprep.mubr.bf16.mxu0 %v818
      %1342 = vmatmul.mubr.bf16.gmra.mxu0 %v817
      %v1343 = vpop.f32.mrf.mxu0
      %v1344 = vadd.f32 %v411, %v1343
      %v1345 = vpop.f32.mrf.mxu0
      %v1346 = vpop.f32.mrf.mxu0
      %v1347 = vadd.f32 %v411, %v1346
      %v1348 = vpop.f32.mrf.mxu0
      %1349 = vmatprep.mubr.bf16.mxu0 %v822
      %1350 = vmatmul.mubr.bf16.gmra.mxu0 %v821
      %v1351 = vpop.f32.mrf.mxu0
      %v1352 = vadd.f32 %v411, %v1351
      %v1353 = vpop.f32.mrf.mxu0
      %v1354 = vpop.f32.mrf.mxu0
      %v1355 = vadd.f32 %v411, %v1354
      %v1356 = vpop.f32.mrf.mxu0
      %1357 = vmatprep.mubr.bf16.mxu0 %v826
      %1358 = vmatmul.mubr.bf16.gmra.mxu0 %v825
      %v1359 = vpop.f32.mrf.mxu0
      %v1360 = vadd.f32 %v411, %v1359
      %v1361 = vpop.f32.mrf.mxu0
      %v1362 = vpop.f32.mrf.mxu0
      %v1363 = vadd.f32 %v411, %v1362
      %v1364 = vpop.f32.mrf.mxu0
      %1365 = vmatprep.mubr.bf16.mxu0 %v830
      %1366 = vmatmul.mubr.bf16.gmra.mxu0 %v829
      %v1367 = vpop.f32.mrf.mxu0
      %v1368 = vadd.f32 %v411, %v1367
      %v1369 = vpop.f32.mrf.mxu0
      %v1370 = vpop.f32.mrf.mxu0
      %v1371 = vadd.f32 %v411, %v1370
      %v1372 = vpop.f32.mrf.mxu0
      %1373 = vmatprep.mubr.bf16.mxu0 %v834
      %1374 = vmatmul.mubr.bf16.gmra.mxu0 %v833
      %v1375 = vpop.f32.mrf.mxu0
      %v1376 = vadd.f32 %v411, %v1375
      %v1377 = vpop.f32.mrf.mxu0
      %v1378 = vpop.f32.mrf.mxu0
      %v1379 = vadd.f32 %v411, %v1378
      %v1380 = vpop.f32.mrf.mxu0
      %1381 = vmatprep.mubr.bf16.mxu0 %v838
      %1382 = vmatmul.mubr.bf16.gmra.mxu0 %v837
      %v1383 = vpop.f32.mrf.mxu0
      %v1384 = vadd.f32 %v411, %v1383
      %v1385 = vpop.f32.mrf.mxu0
      %v1386 = vpop.f32.mrf.mxu0
      %v1387 = vadd.f32 %v411, %v1386
      %v1388 = vpop.f32.mrf.mxu0
      %1389 = vmatprep.mubr.bf16.mxu0 %v842
      %1390 = vmatmul.mubr.bf16.gmra.mxu0 %v841
      %v1391 = vpop.f32.mrf.mxu0
      %v1392 = vadd.f32 %v411, %v1391
      %v1393 = vpop.f32.mrf.mxu0
      %v1394 = vpop.f32.mrf.mxu0
      %v1395 = vadd.f32 %v411, %v1394
      %v1396 = vpop.f32.mrf.mxu0
      %1397 = vmatprep.mubr.bf16.mxu0 %v846
      %1398 = vmatmul.mubr.bf16.gmra.mxu0 %v845
      %v1399 = vpop.f32.mrf.mxu0
      %v1400 = vadd.f32 %v411, %v1399
      %v1401 = vpop.f32.mrf.mxu0
      %v1402 = vpop.f32.mrf.mxu0
      %v1403 = vadd.f32 %v411, %v1402
      %v1404 = vpop.f32.mrf.mxu0
      %1405 = vmatprep.mubr.bf16.mxu0 %v850
      %1406 = vmatmul.mubr.bf16.gmra.mxu0 %v849
      %v1407 = vpop.f32.mrf.mxu0
      %v1408 = vadd.f32 %v411, %v1407
      %v1409 = vpop.f32.mrf.mxu0
      %v1410 = vpop.f32.mrf.mxu0
      %v1411 = vadd.f32 %v411, %v1410
      %v1412 = vpop.f32.mrf.mxu0
      %1413 = vmatprep.mubr.bf16.mxu0 %v854
      %1414 = vmatmul.mubr.bf16.gmra.mxu0 %v853
      %v1415 = vpop.f32.mrf.mxu0
      %v1416 = vadd.f32 %v411, %v1415
      %v1417 = vpop.f32.mrf.mxu0
      %v1418 = vpop.f32.mrf.mxu0
      %v1419 = vadd.f32 %v411, %v1418
      %v1420 = vpop.f32.mrf.mxu0
      %1421 = vmatprep.mubr.bf16.mxu0 %v858
      %1422 = vmatmul.mubr.bf16.gmra.mxu0 %v857
      %v1423 = vpop.f32.mrf.mxu0
      %v1424 = vadd.f32 %v411, %v1423
      %v1425 = vpop.f32.mrf.mxu0
      %v1426 = vpop.f32.mrf.mxu0
      %v1427 = vadd.f32 %v411, %v1426
      %v1428 = vpop.f32.mrf.mxu0
      %1429 = vmatprep.mubr.bf16.mxu0 %v862
      %1430 = vmatmul.mubr.bf16.gmra.mxu0 %v861
      %v1431 = vpop.f32.mrf.mxu0
      %v1432 = vadd.f32 %v411, %v1431
      %v1433 = vpop.f32.mrf.mxu0
      %v1434 = vpop.f32.mrf.mxu0
      %v1435 = vadd.f32 %v411, %v1434
      %v1436 = vpop.f32.mrf.mxu0
      %1437 = vmatprep.mubr.bf16.mxu0 %v866
      %1438 = vmatmul.mubr.bf16.gmra.mxu0 %v865
      %v1439 = vpop.f32.mrf.mxu0
      %v1440 = vadd.f32 %v411, %v1439
      %v1441 = vpop.f32.mrf.mxu0
      %v1442 = vpop.f32.mrf.mxu0
      %v1443 = vadd.f32 %v411, %v1442
      %v1444 = vpop.f32.mrf.mxu0
      %1445 = vmatprep.mubr.bf16.mxu0 %v870
      %1446 = vmatmul.mubr.bf16.gmra.mxu0 %v869
      %v1447 = vpop.f32.mrf.mxu0
      %v1448 = vadd.f32 %v411, %v1447
      %v1449 = vpop.f32.mrf.mxu0
      %v1450 = vpop.f32.mrf.mxu0
      %v1451 = vadd.f32 %v411, %v1450
      %v1452 = vpop.f32.mrf.mxu0
      %1453 = vmatprep.mubr.bf16.mxu0 %v874
      %1454 = vmatmul.mubr.bf16.gmra.mxu0 %v873
      %v1455 = vpop.f32.mrf.mxu0
      %v1456 = vadd.f32 %v411, %v1455
      %v1457 = vpop.f32.mrf.mxu0
      %v1458 = vpop.f32.mrf.mxu0
      %v1459 = vadd.f32 %v411, %v1458
      %v1460 = vpop.f32.mrf.mxu0
      %1461 = vmatprep.mubr.bf16.mxu0 %v878
      %1462 = vmatmul.mubr.bf16.gmra.mxu0 %v877
      %v1463 = vpop.f32.mrf.mxu0
      %v1464 = vadd.f32 %v411, %v1463
      %v1465 = vpop.f32.mrf.mxu0
      %v1466 = vpop.f32.mrf.mxu0
      %v1467 = vadd.f32 %v411, %v1466
      %v1468 = vpop.f32.mrf.mxu0
      %1469 = vmatprep.mubr.bf16.mxu0 %v882
      %1470 = vmatmul.mubr.bf16.gmra.mxu0 %v881
      %v1471 = vpop.f32.mrf.mxu0
      %v1472 = vadd.f32 %v411, %v1471
      %v1473 = vpop.f32.mrf.mxu0
      %v1474 = vpop.f32.mrf.mxu0
      %v1475 = vadd.f32 %v411, %v1474
      %v1476 = vpop.f32.mrf.mxu0
      %1477 = vmatprep.mubr.bf16.mxu0 %v886
      %1478 = vmatmul.mubr.bf16.gmra.mxu0 %v885
      %v1479 = vpop.f32.mrf.mxu0
      %v1480 = vadd.f32 %v411, %v1479
      %v1481 = vpop.f32.mrf.mxu0
      %v1482 = vpop.f32.mrf.mxu0
      %v1483 = vadd.f32 %v411, %v1482
      %v1484 = vpop.f32.mrf.mxu0
      %1485 = vmatprep.mubr.bf16.mxu0 %v890
      %1486 = vmatmul.mubr.bf16.gmra.mxu0 %v889
      %v1487 = vpop.f32.mrf.mxu0
      %v1488 = vadd.f32 %v411, %v1487
      %v1489 = vpop.f32.mrf.mxu0
      %v1490 = vpop.f32.mrf.mxu0
      %v1491 = vadd.f32 %v411, %v1490
      %v1492 = vpop.f32.mrf.mxu0
      %1493 = vmatprep.mubr.bf16.mxu0 %v894
      %1494 = vmatmul.mubr.bf16.gmra.mxu0 %v893
      %v1495 = vpop.f32.mrf.mxu0
      %v1496 = vadd.f32 %v411, %v1495
      %v1497 = vpop.f32.mrf.mxu0
      %v1498 = vpop.f32.mrf.mxu0
      %v1499 = vadd.f32 %v411, %v1498
      %v1500 = vpop.f32.mrf.mxu0
      %1501 = vmatprep.mubr.bf16.mxu0 %v898
      %1502 = vmatmul.mubr.bf16.gmra.mxu0 %v897
      %v1503 = vpop.f32.mrf.mxu0
      %v1504 = vadd.f32 %v411, %v1503
      %v1505 = vpop.f32.mrf.mxu0
      %v1506 = vpop.f32.mrf.mxu0
      %v1507 = vadd.f32 %v411, %v1506
      %v1508 = vpop.f32.mrf.mxu0
      %1509 = vmatprep.mubr.bf16.mxu0 %v902
      %1510 = vmatmul.mubr.bf16.gmra.mxu0 %v901
      %v1511 = vpop.f32.mrf.mxu0
      %v1512 = vadd.f32 %v411, %v1511
      %v1513 = vpop.f32.mrf.mxu0
      %v1514 = vpop.f32.mrf.mxu0
      %v1515 = vadd.f32 %v411, %v1514
      %v1516 = vpop.f32.mrf.mxu0
      %1517 = vmatprep.mubr.bf16.mxu0 %v906
      %1518 = vmatmul.mubr.bf16.gmra.mxu0 %v905
      %v1519 = vpop.f32.mrf.mxu0
      %v1520 = vadd.f32 %v411, %v1519
      %v1521 = vpop.f32.mrf.mxu0
      %v1522 = vpop.f32.mrf.mxu0
      %v1523 = vadd.f32 %v411, %v1522
      %v1524 = vpop.f32.mrf.mxu0
      %1525 = vmatprep.mubr.bf16.mxu0 %v910
      %1526 = vmatmul.mubr.bf16.gmra.mxu0 %v909
      %v1527 = vpop.f32.mrf.mxu0
      %v1528 = vadd.f32 %v411, %v1527
      %v1529 = vpop.f32.mrf.mxu0
      %v1530 = vpop.f32.mrf.mxu0
      %v1531 = vadd.f32 %v411, %v1530
      %v1532 = vpop.f32.mrf.mxu0
      %1533 = vmatprep.mubr.bf16.mxu0 %v914
      %1534 = vmatmul.mubr.bf16.gmra.mxu0 %v913
      %v1535 = vpop.f32.mrf.mxu0
      %v1536 = vadd.f32 %v411, %v1535
      %v1537 = vpop.f32.mrf.mxu0
      %v1538 = vpop.f32.mrf.mxu0
      %v1539 = vadd.f32 %v411, %v1538
      %v1540 = vpop.f32.mrf.mxu0
      %1541 = vmatprep.mubr.bf16.mxu0 %v918
      %1542 = vmatmul.mubr.bf16.gmra.mxu0 %v917
      %v1543 = vpop.f32.mrf.mxu0
      %v1544 = vadd.f32 %v411, %v1543
      %v1545 = vpop.f32.mrf.mxu0
      %v1546 = vpop.f32.mrf.mxu0
      %v1547 = vadd.f32 %v411, %v1546
      %v1548 = vpop.f32.mrf.mxu0
      %1549 = vmatprep.mubr.bf16.mxu0 %v922
      %1550 = vmatmul.mubr.bf16.gmra.mxu0 %v921
      %v1551 = vpop.f32.mrf.mxu0
      %v1552 = vadd.f32 %v411, %v1551
      %v1553 = vpop.f32.mrf.mxu0
      %v1554 = vpop.f32.mrf.mxu0
      %v1555 = vadd.f32 %v411, %v1554
      %v1556 = vpop.f32.mrf.mxu0
      %1557 = vdwg.mxu0
      %1558 = vmatprep.subr.bf16.mxu0 0
      %1559 = vmatpush1.bf16.msra.mxu0 %v1142
      %1560 = vmatprep.subr.bf16.mxu0 0
      %1561 = vmatpush1.bf16.msra.mxu0 %v1141
      %1562 = vmatprep.subr.bf16.mxu0 0
      %1563 = vmatpush1.bf16.msra.mxu0 %v1140
      %1564 = vmatprep.subr.bf16.mxu0 0
      %1565 = vmatpush1.bf16.msra.mxu0 %v1139
      %1566 = vmatprep.subr.bf16.mxu0 0
      %1567 = vmatpush1.bf16.msra.mxu0 %v1138
      %1568 = vmatprep.subr.bf16.mxu0 0
      %1569 = vmatpush1.bf16.msra.mxu0 %v1137
      %1570 = vmatprep.subr.bf16.mxu0 0
      %1571 = vmatpush1.bf16.msra.mxu0 %v1136
      %1572 = vmatprep.subr.bf16.mxu0 0
      %1573 = vmatpush1.bf16.msra.mxu0 %v1135
      %1574 = vmatprep.subr.bf16.mxu0 0
      %1575 = vmatpush2.bf16.msra.mxu0 0
      %1576 = vmatprep.subr.bf16.mxu0 0
      %1577 = vmatpush2.bf16.msra.mxu0 0
      %1578 = vmatprep.subr.bf16.mxu0 0
      %1579 = vmatpush2.bf16.msra.mxu0 0
      %1580 = vmatprep.subr.bf16.mxu0 0
      %1581 = vmatpush2.bf16.msra.mxu0 0
      %1582 = vmatprep.subr.bf16.mxu0 0
      %1583 = vmatpush2.bf16.msra.mxu0 0
      %1584 = vmatprep.subr.bf16.mxu0 0
      %1585 = vmatpush2.bf16.msra.mxu0 0
      %1586 = vmatprep.subr.bf16.mxu0 0
      %1587 = vmatpush2.bf16.msra.mxu0 0
      %1588 = vmatprep.subr.bf16.mxu0 0
      %1589 = vmatpush2.bf16.msra.mxu0 %v1267
      %1590 = vmatprep.mubr.bf16.mxu0 %v1170
      %1591 = vmatmul.mubr.bf16.gmra.mxu0 %v799
      %v1592 = vpop.f32.mrf.mxu0
      %v1593 = vadd.f32 %v1304, %v1592
      %v1594 = vpop.f32.mrf.mxu0
      %v1595 = vpop.f32.mrf.mxu0
      %v1596 = vadd.f32 %v1307, %v1595
      %v1597 = vpop.f32.mrf.mxu0
      %1598 = vmatprep.mubr.bf16.mxu0 %v1173
      %1599 = vmatmul.mubr.bf16.gmra.mxu0 %v803
      %v1600 = vpop.f32.mrf.mxu0
      %v1601 = vadd.f32 %v1312, %v1600
      %v1602 = vpop.f32.mrf.mxu0
      %v1603 = vpop.f32.mrf.mxu0
      %v1604 = vadd.f32 %v1315, %v1603
      %v1605 = vpop.f32.mrf.mxu0
      %1606 = vmatprep.mubr.bf16.mxu0 %v1176
      %1607 = vmatmul.mubr.bf16.gmra.mxu0 %v807
      %v1608 = vpop.f32.mrf.mxu0
      %v1609 = vadd.f32 %v1320, %v1608
      %v1610 = vpop.f32.mrf.mxu0
      %v1611 = vpop.f32.mrf.mxu0
      %v1612 = vadd.f32 %v1323, %v1611
      %v1613 = vpop.f32.mrf.mxu0
      %1614 = vmatprep.mubr.bf16.mxu0 %v1179
      %1615 = vmatmul.mubr.bf16.gmra.mxu0 %v811
      %v1616 = vpop.f32.mrf.mxu0
      %v1617 = vadd.f32 %v1328, %v1616
      %v1618 = vpop.f32.mrf.mxu0
      %v1619 = vpop.f32.mrf.mxu0
      %v1620 = vadd.f32 %v1331, %v1619
      %v1621 = vpop.f32.mrf.mxu0
      %1622 = vmatprep.mubr.bf16.mxu0 %v1182
      %1623 = vmatmul.mubr.bf16.gmra.mxu0 %v815
      %v1624 = vpop.f32.mrf.mxu0
      %v1625 = vadd.f32 %v1336, %v1624
      %v1626 = vpop.f32.mrf.mxu0
      %v1627 = vpop.f32.mrf.mxu0
      %v1628 = vadd.f32 %v1339, %v1627
      %v1629 = vpop.f32.mrf.mxu0
      %1630 = vmatprep.mubr.bf16.mxu0 %v1185
      %1631 = vmatmul.mubr.bf16.gmra.mxu0 %v819
      %v1632 = vpop.f32.mrf.mxu0
      %v1633 = vadd.f32 %v1344, %v1632
      %v1634 = vpop.f32.mrf.mxu0
      %v1635 = vpop.f32.mrf.mxu0
      %v1636 = vadd.f32 %v1347, %v1635
      %v1637 = vpop.f32.mrf.mxu0
      %1638 = vmatprep.mubr.bf16.mxu0 %v1188
      %1639 = vmatmul.mubr.bf16.gmra.mxu0 %v823
      %v1640 = vpop.f32.mrf.mxu0
      %v1641 = vadd.f32 %v1352, %v1640
      %v1642 = vpop.f32.mrf.mxu0
      %v1643 = vpop.f32.mrf.mxu0
      %v1644 = vadd.f32 %v1355, %v1643
      %v1645 = vpop.f32.mrf.mxu0
      %1646 = vmatprep.mubr.bf16.mxu0 %v1191
      %1647 = vmatmul.mubr.bf16.gmra.mxu0 %v827
      %v1648 = vpop.f32.mrf.mxu0
      %v1649 = vadd.f32 %v1360, %v1648
      %v1650 = vpop.f32.mrf.mxu0
      %v1651 = vpop.f32.mrf.mxu0
      %v1652 = vadd.f32 %v1363, %v1651
      %v1653 = vpop.f32.mrf.mxu0
      %1654 = vmatprep.mubr.bf16.mxu0 %v1194
      %1655 = vmatmul.mubr.bf16.gmra.mxu0 %v831
      %v1656 = vpop.f32.mrf.mxu0
      %v1657 = vadd.f32 %v1368, %v1656
      %v1658 = vpop.f32.mrf.mxu0
      %v1659 = vpop.f32.mrf.mxu0
      %v1660 = vadd.f32 %v1371, %v1659
      %v1661 = vpop.f32.mrf.mxu0
      %1662 = vmatprep.mubr.bf16.mxu0 %v1197
      %1663 = vmatmul.mubr.bf16.gmra.mxu0 %v835
      %v1664 = vpop.f32.mrf.mxu0
      %v1665 = vadd.f32 %v1376, %v1664
      %v1666 = vpop.f32.mrf.mxu0
      %v1667 = vpop.f32.mrf.mxu0
      %v1668 = vadd.f32 %v1379, %v1667
      %v1669 = vpop.f32.mrf.mxu0
      %1670 = vmatprep.mubr.bf16.mxu0 %v1200
      %1671 = vmatmul.mubr.bf16.gmra.mxu0 %v839
      %v1672 = vpop.f32.mrf.mxu0
      %v1673 = vadd.f32 %v1384, %v1672
      %v1674 = vpop.f32.mrf.mxu0
      %v1675 = vpop.f32.mrf.mxu0
      %v1676 = vadd.f32 %v1387, %v1675
      %v1677 = vpop.f32.mrf.mxu0
      %1678 = vmatprep.mubr.bf16.mxu0 %v1203
      %1679 = vmatmul.mubr.bf16.gmra.mxu0 %v843
      %v1680 = vpop.f32.mrf.mxu0
      %v1681 = vadd.f32 %v1392, %v1680
      %v1682 = vpop.f32.mrf.mxu0
      %v1683 = vpop.f32.mrf.mxu0
      %v1684 = vadd.f32 %v1395, %v1683
      %v1685 = vpop.f32.mrf.mxu0
      %1686 = vmatprep.mubr.bf16.mxu0 %v1206
      %1687 = vmatmul.mubr.bf16.gmra.mxu0 %v847
      %v1688 = vpop.f32.mrf.mxu0
      %v1689 = vadd.f32 %v1400, %v1688
      %v1690 = vpop.f32.mrf.mxu0
      %v1691 = vpop.f32.mrf.mxu0
      %v1692 = vadd.f32 %v1403, %v1691
      %v1693 = vpop.f32.mrf.mxu0
      %1694 = vmatprep.mubr.bf16.mxu0 %v1209
      %1695 = vmatmul.mubr.bf16.gmra.mxu0 %v851
      %v1696 = vpop.f32.mrf.mxu0
      %v1697 = vadd.f32 %v1408, %v1696
      %v1698 = vpop.f32.mrf.mxu0
      %v1699 = vpop.f32.mrf.mxu0
      %v1700 = vadd.f32 %v1411, %v1699
      %v1701 = vpop.f32.mrf.mxu0
      %1702 = vmatprep.mubr.bf16.mxu0 %v1212
      %1703 = vmatmul.mubr.bf16.gmra.mxu0 %v855
      %v1704 = vpop.f32.mrf.mxu0
      %v1705 = vadd.f32 %v1416, %v1704
      %v1706 = vpop.f32.mrf.mxu0
      %v1707 = vpop.f32.mrf.mxu0
      %v1708 = vadd.f32 %v1419, %v1707
      %v1709 = vpop.f32.mrf.mxu0
      %1710 = vmatprep.mubr.bf16.mxu0 %v1215
      %1711 = vmatmul.mubr.bf16.gmra.mxu0 %v859
      %v1712 = vpop.f32.mrf.mxu0
      %v1713 = vadd.f32 %v1424, %v1712
      %v1714 = vpop.f32.mrf.mxu0
      %v1715 = vpop.f32.mrf.mxu0
      %v1716 = vadd.f32 %v1427, %v1715
      %v1717 = vpop.f32.mrf.mxu0
      %1718 = vmatprep.mubr.bf16.mxu0 %v1218
      %1719 = vmatmul.mubr.bf16.gmra.mxu0 %v863
      %v1720 = vpop.f32.mrf.mxu0
      %v1721 = vadd.f32 %v1432, %v1720
      %v1722 = vpop.f32.mrf.mxu0
      %v1723 = vpop.f32.mrf.mxu0
      %v1724 = vadd.f32 %v1435, %v1723
      %v1725 = vpop.f32.mrf.mxu0
      %1726 = vmatprep.mubr.bf16.mxu0 %v1221
      %1727 = vmatmul.mubr.bf16.gmra.mxu0 %v867
      %v1728 = vpop.f32.mrf.mxu0
      %v1729 = vadd.f32 %v1440, %v1728
      %v1730 = vpop.f32.mrf.mxu0
      %v1731 = vpop.f32.mrf.mxu0
      %v1732 = vadd.f32 %v1443, %v1731
      %v1733 = vpop.f32.mrf.mxu0
      %1734 = vmatprep.mubr.bf16.mxu0 %v1224
      %1735 = vmatmul.mubr.bf16.gmra.mxu0 %v871
      %v1736 = vpop.f32.mrf.mxu0
      %v1737 = vadd.f32 %v1448, %v1736
      %v1738 = vpop.f32.mrf.mxu0
      %v1739 = vpop.f32.mrf.mxu0
      %v1740 = vadd.f32 %v1451, %v1739
      %v1741 = vpop.f32.mrf.mxu0
      %1742 = vmatprep.mubr.bf16.mxu0 %v1227
      %1743 = vmatmul.mubr.bf16.gmra.mxu0 %v875
      %v1744 = vpop.f32.mrf.mxu0
      %v1745 = vadd.f32 %v1456, %v1744
      %v1746 = vpop.f32.mrf.mxu0
      %v1747 = vpop.f32.mrf.mxu0
      %v1748 = vadd.f32 %v1459, %v1747
      %v1749 = vpop.f32.mrf.mxu0
      %1750 = vmatprep.mubr.bf16.mxu0 %v1230
      %1751 = vmatmul.mubr.bf16.gmra.mxu0 %v879
      %v1752 = vpop.f32.mrf.mxu0
      %v1753 = vadd.f32 %v1464, %v1752
      %v1754 = vpop.f32.mrf.mxu0
      %v1755 = vpop.f32.mrf.mxu0
      %v1756 = vadd.f32 %v1467, %v1755
      %v1757 = vpop.f32.mrf.mxu0
      %1758 = vmatprep.mubr.bf16.mxu0 %v1233
      %1759 = vmatmul.mubr.bf16.gmra.mxu0 %v883
      %v1760 = vpop.f32.mrf.mxu0
      %v1761 = vadd.f32 %v1472, %v1760
      %v1762 = vpop.f32.mrf.mxu0
      %v1763 = vpop.f32.mrf.mxu0
      %v1764 = vadd.f32 %v1475, %v1763
      %v1765 = vpop.f32.mrf.mxu0
      %1766 = vmatprep.mubr.bf16.mxu0 %v1236
      %1767 = vmatmul.mubr.bf16.gmra.mxu0 %v887
      %v1768 = vpop.f32.mrf.mxu0
      %v1769 = vadd.f32 %v1480, %v1768
      %v1770 = vpop.f32.mrf.mxu0
      %v1771 = vpop.f32.mrf.mxu0
      %v1772 = vadd.f32 %v1483, %v1771
      %v1773 = vpop.f32.mrf.mxu0
      %1774 = vmatprep.mubr.bf16.mxu0 %v1239
      %1775 = vmatmul.mubr.bf16.gmra.mxu0 %v891
      %v1776 = vpop.f32.mrf.mxu0
      %v1777 = vadd.f32 %v1488, %v1776
      %v1778 = vpop.f32.mrf.mxu0
      %v1779 = vpop.f32.mrf.mxu0
      %v1780 = vadd.f32 %v1491, %v1779
      %v1781 = vpop.f32.mrf.mxu0
      %1782 = vmatprep.mubr.bf16.mxu0 %v1242
      %1783 = vmatmul.mubr.bf16.gmra.mxu0 %v895
      %v1784 = vpop.f32.mrf.mxu0
      %v1785 = vadd.f32 %v1496, %v1784
      %v1786 = vpop.f32.mrf.mxu0
      %v1787 = vpop.f32.mrf.mxu0
      %v1788 = vadd.f32 %v1499, %v1787
      %v1789 = vpop.f32.mrf.mxu0
      %1790 = vmatprep.mubr.bf16.mxu0 %v1245
      %1791 = vmatmul.mubr.bf16.gmra.mxu0 %v899
      %v1792 = vpop.f32.mrf.mxu0
      %v1793 = vadd.f32 %v1504, %v1792
      %v1794 = vpop.f32.mrf.mxu0
      %v1795 = vpop.f32.mrf.mxu0
      %v1796 = vadd.f32 %v1507, %v1795
      %v1797 = vpop.f32.mrf.mxu0
      %1798 = vmatprep.mubr.bf16.mxu0 %v1248
      %1799 = vmatmul.mubr.bf16.gmra.mxu0 %v903
      %v1800 = vpop.f32.mrf.mxu0
      %v1801 = vadd.f32 %v1512, %v1800
      %v1802 = vpop.f32.mrf.mxu0
      %v1803 = vpop.f32.mrf.mxu0
      %v1804 = vadd.f32 %v1515, %v1803
      %v1805 = vpop.f32.mrf.mxu0
      %1806 = vmatprep.mubr.bf16.mxu0 %v1251
      %1807 = vmatmul.mubr.bf16.gmra.mxu0 %v907
      %v1808 = vpop.f32.mrf.mxu0
      %v1809 = vadd.f32 %v1520, %v1808
      %v1810 = vpop.f32.mrf.mxu0
      %v1811 = vpop.f32.mrf.mxu0
      %v1812 = vadd.f32 %v1523, %v1811
      %v1813 = vpop.f32.mrf.mxu0
      %1814 = vmatprep.mubr.bf16.mxu0 %v1254
      %1815 = vmatmul.mubr.bf16.gmra.mxu0 %v911
      %v1816 = vpop.f32.mrf.mxu0
      %v1817 = vadd.f32 %v1528, %v1816
      %v1818 = vpop.f32.mrf.mxu0
      %v1819 = vpop.f32.mrf.mxu0
      %v1820 = vadd.f32 %v1531, %v1819
      %v1821 = vpop.f32.mrf.mxu0
      %1822 = vmatprep.mubr.bf16.mxu0 %v1257
      %1823 = vmatmul.mubr.bf16.gmra.mxu0 %v915
      %v1824 = vpop.f32.mrf.mxu0
      %v1825 = vadd.f32 %v1536, %v1824
      %v1826 = vpop.f32.mrf.mxu0
      %v1827 = vpop.f32.mrf.mxu0
      %v1828 = vadd.f32 %v1539, %v1827
      %v1829 = vpop.f32.mrf.mxu0
      %1830 = vmatprep.mubr.bf16.mxu0 %v1260
      %1831 = vmatmul.mubr.bf16.gmra.mxu0 %v919
      %v1832 = vpop.f32.mrf.mxu0
      %v1833 = vadd.f32 %v1544, %v1832
      %v1834 = vpop.f32.mrf.mxu0
      %v1835 = vpop.f32.mrf.mxu0
      %v1836 = vadd.f32 %v1547, %v1835
      %v1837 = vpop.f32.mrf.mxu0
      %1838 = vmatprep.mubr.bf16.mxu0 %v1263
      %1839 = vmatmul.mubr.bf16.gmra.mxu0 %v923
      %v1840 = vpop.f32.mrf.mxu0
      %v1841 = vadd.f32 %v1552, %v1840
      %v1842 = vpop.f32.mrf.mxu0
      %v1843 = vpop.f32.mrf.mxu0
      %v1844 = vadd.f32 %v1555, %v1843
      %v1845 = vpop.f32.mrf.mxu0
      %1846 = vdwg.mxu0
      %v1847 = vmax.f32 %v1593, 0.0
      %v1848 = vmax.f32 %v1596, 0.0
      %v1849 = vmax.f32 %v1601, 0.0
      %v1850 = vmax.f32 %v1604, 0.0
      %v1851 = vmax.f32 %v1609, 0.0
      %v1852 = vmax.f32 %v1612, 0.0
      %v1853 = vmax.f32 %v1617, 0.0
      %v1854 = vmax.f32 %v1620, 0.0
      %v1855 = vmax.f32 %v1625, 0.0
      %v1856 = vmax.f32 %v1628, 0.0
      %v1857 = vmax.f32 %v1633, 0.0
      %v1858 = vmax.f32 %v1636, 0.0
      %v1859 = vmax.f32 %v1641, 0.0
      %v1860 = vmax.f32 %v1644, 0.0
      %v1861 = vmax.f32 %v1649, 0.0
      %v1862 = vmax.f32 %v1652, 0.0
      %v1863 = vmax.f32 %v1657, 0.0
      %v1864 = vmax.f32 %v1660, 0.0
      %v1865 = vmax.f32 %v1665, 0.0
      %v1866 = vmax.f32 %v1668, 0.0
      %v1867 = vmax.f32 %v1673, 0.0
      %v1868 = vmax.f32 %v1676, 0.0
      %v1869 = vmax.f32 %v1681, 0.0
      %v1870 = vmax.f32 %v1684, 0.0
      %v1871 = vmax.f32 %v1689, 0.0
      %v1872 = vmax.f32 %v1692, 0.0
      %v1873 = vmax.f32 %v1697, 0.0
      %v1874 = vmax.f32 %v1700, 0.0
      %v1875 = vmax.f32 %v1705, 0.0
      %v1876 = vmax.f32 %v1708, 0.0
      %v1877 = vmax.f32 %v1713, 0.0
      %v1878 = vmax.f32 %v1716, 0.0
      %v1879 = vmax.f32 %v1721, 0.0
      %v1880 = vmax.f32 %v1724, 0.0
      %v1881 = vmax.f32 %v1729, 0.0
      %v1882 = vmax.f32 %v1732, 0.0
      %v1883 = vmax.f32 %v1737, 0.0
      %v1884 = vmax.f32 %v1740, 0.0
      %v1885 = vmax.f32 %v1745, 0.0
      %v1886 = vmax.f32 %v1748, 0.0
      %v1887 = vmax.f32 %v1753, 0.0
      %v1888 = vmax.f32 %v1756, 0.0
      %v1889 = vmax.f32 %v1761, 0.0
      %v1890 = vmax.f32 %v1764, 0.0
      %v1891 = vmax.f32 %v1769, 0.0
      %v1892 = vmax.f32 %v1772, 0.0
      %v1893 = vmax.f32 %v1777, 0.0
      %v1894 = vmax.f32 %v1780, 0.0
      %v1895 = vmax.f32 %v1785, 0.0
      %v1896 = vmax.f32 %v1788, 0.0
      %v1897 = vmax.f32 %v1793, 0.0
      %v1898 = vmax.f32 %v1796, 0.0
      %v1899 = vmax.f32 %v1801, 0.0
      %v1900 = vmax.f32 %v1804, 0.0
      %v1901 = vmax.f32 %v1809, 0.0
      %v1902 = vmax.f32 %v1812, 0.0
      %v1903 = vmax.f32 %v1817, 0.0
      %v1904 = vmax.f32 %v1820, 0.0
      %v1905 = vmax.f32 %v1825, 0.0
      %v1906 = vmax.f32 %v1828, 0.0
      %v1907 = vmax.f32 %v1833, 0.0
      %v1908 = vmax.f32 %v1836, 0.0
      %v1909 = vmax.f32 %v1841, 0.0
      %v1910 = vmax.f32 %v1844, 0.0
      %v1911 = vpack.c.bf16 %v1848, %v1847
      %v1912 = vpack.c.bf16 %v1850, %v1849
      %v1913 = vpack.c.bf16 %v1852, %v1851
      %v1914 = vpack.c.bf16 %v1854, %v1853
      %v1915 = vpack.c.bf16 %v1856, %v1855
      %v1916 = vpack.c.bf16 %v1858, %v1857
      %v1917 = vpack.c.bf16 %v1860, %v1859
      %v1918 = vpack.c.bf16 %v1862, %v1861
      %v1919 = vpack.c.bf16 %v1864, %v1863
      %v1920 = vpack.c.bf16 %v1866, %v1865
      %v1921 = vpack.c.bf16 %v1868, %v1867
      %v1922 = vpack.c.bf16 %v1870, %v1869
      %v1923 = vpack.c.bf16 %v1872, %v1871
      %v1924 = vpack.c.bf16 %v1874, %v1873
      %v1925 = vpack.c.bf16 %v1876, %v1875
      %v1926 = vpack.c.bf16 %v1878, %v1877
      %v1927 = vpack.c.bf16 %v1880, %v1879
      %v1928 = vpack.c.bf16 %v1882, %v1881
      %v1929 = vpack.c.bf16 %v1884, %v1883
      %v1930 = vpack.c.bf16 %v1886, %v1885
      %v1931 = vpack.c.bf16 %v1888, %v1887
      %v1932 = vpack.c.bf16 %v1890, %v1889
      %v1933 = vpack.c.bf16 %v1892, %v1891
      %v1934 = vpack.c.bf16 %v1894, %v1893
      %v1935 = vpack.c.bf16 %v1896, %v1895
      %v1936 = vpack.c.bf16 %v1898, %v1897
      %v1937 = vpack.c.bf16 %v1900, %v1899
      %v1938 = vpack.c.bf16 %v1902, %v1901
      %v1939 = vpack.c.bf16 %v1904, %v1903
      %v1940 = vpack.c.bf16 %v1906, %v1905
      %v1941 = vpack.c.bf16 %v1908, %v1907
      %v1942 = vpack.c.bf16 %v1910, %v1909
      %v1975 = vunpack.c.l.b16 %v1911
      %v1976 = vunpack.c.h.b16 %v1911
      %v1977 = vunpack.c.l.b16 %v1912
      %v1978 = vunpack.c.h.b16 %v1912
      %v1979 = vunpack.c.l.b16 %v1913
      %v1980 = vunpack.c.h.b16 %v1913
      %v1981 = vunpack.c.l.b16 %v1914
      %v1982 = vunpack.c.h.b16 %v1914
      %v1983 = vunpack.c.l.b16 %v1915
      %v1984 = vunpack.c.h.b16 %v1915
      %v1985 = vunpack.c.l.b16 %v1916
      %v1986 = vunpack.c.h.b16 %v1916
      %v1987 = vunpack.c.l.b16 %v1917
      %v1988 = vunpack.c.h.b16 %v1917
      %v1989 = vunpack.c.l.b16 %v1918
      %v1990 = vunpack.c.h.b16 %v1918
      %v1991 = vunpack.c.l.b16 %v1919
      %v1992 = vunpack.c.h.b16 %v1919
      %v1993 = vunpack.c.l.b16 %v1920
      %v1994 = vunpack.c.h.b16 %v1920
      %v1995 = vunpack.c.l.b16 %v1921
      %v1996 = vunpack.c.h.b16 %v1921
      %v1997 = vunpack.c.l.b16 %v1922
      %v1998 = vunpack.c.h.b16 %v1922
      %v1999 = vunpack.c.l.b16 %v1923
      %v2000 = vunpack.c.h.b16 %v1923
      %v2001 = vunpack.c.l.b16 %v1924
      %v2002 = vunpack.c.h.b16 %v1924
      %v2003 = vunpack.c.l.b16 %v1925
      %v2004 = vunpack.c.h.b16 %v1925
      %v2005 = vunpack.c.l.b16 %v1926
      %v2006 = vunpack.c.h.b16 %v1926
      %v2007 = vunpack.c.l.b16 %v1927
      %v2008 = vunpack.c.h.b16 %v1927
      %v2009 = vunpack.c.l.b16 %v1928
      %v2010 = vunpack.c.h.b16 %v1928
      %v2011 = vunpack.c.l.b16 %v1929
      %v2012 = vunpack.c.h.b16 %v1929
      %v2013 = vunpack.c.l.b16 %v1930
      %v2014 = vunpack.c.h.b16 %v1930
      %v2015 = vunpack.c.l.b16 %v1931
      %v2016 = vunpack.c.h.b16 %v1931
      %v2017 = vunpack.c.l.b16 %v1932
      %v2018 = vunpack.c.h.b16 %v1932
      %v2019 = vunpack.c.l.b16 %v1933
      %v2020 = vunpack.c.h.b16 %v1933
      %v2021 = vunpack.c.l.b16 %v1934
      %v2022 = vunpack.c.h.b16 %v1934
      %v2023 = vunpack.c.l.b16 %v1935
      %v2024 = vunpack.c.h.b16 %v1935
      %v2025 = vunpack.c.l.b16 %v1936
      %v2026 = vunpack.c.h.b16 %v1936
      %v2027 = vunpack.c.l.b16 %v1937
      %v2028 = vunpack.c.h.b16 %v1937
      %v2029 = vunpack.c.l.b16 %v1938
      %v2030 = vunpack.c.h.b16 %v1938
      %v2031 = vunpack.c.l.b16 %v1939
      %v2032 = vunpack.c.h.b16 %v1939
      %v2033 = vunpack.c.l.b16 %v1940
      %v2034 = vunpack.c.h.b16 %v1940
      %v2035 = vunpack.c.l.b16 %v1941
      %v2036 = vunpack.c.h.b16 %v1941
      %v2037 = vunpack.c.l.b16 %v1942
      %v2038 = vunpack.c.h.b16 %v1942
      %v2039 = vpack.c.b16 %v1975, %v1975
      %v2040 = vpack.c.b16 %v1976, %v1976
      %v2041 = vpack.c.b16 %v1977, %v1977
      %v2042 = vpack.c.b16 %v1978, %v1978
      %v2043 = vpack.c.b16 %v1979, %v1979
      %v2044 = vpack.c.b16 %v1980, %v1980
      %v2045 = vpack.c.b16 %v1981, %v1981
      %v2046 = vpack.c.b16 %v1982, %v1982
      %v2047 = vpack.c.b16 %v1983, %v1983
      %v2048 = vpack.c.b16 %v1984, %v1984
      %v2049 = vpack.c.b16 %v1985, %v1985
      %v2050 = vpack.c.b16 %v1986, %v1986
      %v2051 = vpack.c.b16 %v1987, %v1987
      %v2052 = vpack.c.b16 %v1988, %v1988
      %v2053 = vpack.c.b16 %v1989, %v1989
      %v2054 = vpack.c.b16 %v1990, %v1990
      %v2055 = vpack.c.b16 %v1991, %v1991
      %v2056 = vpack.c.b16 %v1992, %v1992
      %v2057 = vpack.c.b16 %v1993, %v1993
      %v2058 = vpack.c.b16 %v1994, %v1994
      %v2059 = vpack.c.b16 %v1995, %v1995
      %v2060 = vpack.c.b16 %v1996, %v1996
      %v2061 = vpack.c.b16 %v1997, %v1997
      %v2062 = vpack.c.b16 %v1998, %v1998
      %v2063 = vpack.c.b16 %v1999, %v1999
      %v2064 = vpack.c.b16 %v2000, %v2000
      %v2065 = vpack.c.b16 %v2001, %v2001
      %v2066 = vpack.c.b16 %v2002, %v2002
      %v2067 = vpack.c.b16 %v2003, %v2003
      %v2068 = vpack.c.b16 %v2004, %v2004
      %v2069 = vpack.c.b16 %v2005, %v2005
      %v2070 = vpack.c.b16 %v2006, %v2006
      %v2071 = vpack.c.b16 %v2007, %v2007
      %v2072 = vpack.c.b16 %v2008, %v2008
      %v2073 = vpack.c.b16 %v2009, %v2009
      %v2074 = vpack.c.b16 %v2010, %v2010
      %v2075 = vpack.c.b16 %v2011, %v2011
      %v2076 = vpack.c.b16 %v2012, %v2012
      %v2077 = vpack.c.b16 %v2013, %v2013
      %v2078 = vpack.c.b16 %v2014, %v2014
      %v2079 = vpack.c.b16 %v2015, %v2015
      %v2080 = vpack.c.b16 %v2016, %v2016
      %v2081 = vpack.c.b16 %v2017, %v2017
      %v2082 = vpack.c.b16 %v2018, %v2018
      %v2083 = vpack.c.b16 %v2019, %v2019
      %v2084 = vpack.c.b16 %v2020, %v2020
      %v2085 = vpack.c.b16 %v2021, %v2021
      %v2086 = vpack.c.b16 %v2022, %v2022
      %v2087 = vpack.c.b16 %v2023, %v2023
      %v2088 = vpack.c.b16 %v2024, %v2024
      %v2089 = vpack.c.b16 %v2025, %v2025
      %v2090 = vpack.c.b16 %v2026, %v2026
      %v2091 = vpack.c.b16 %v2027, %v2027
      %v2092 = vpack.c.b16 %v2028, %v2028
      %v2093 = vpack.c.b16 %v2029, %v2029
      %v2094 = vpack.c.b16 %v2030, %v2030
      %v2095 = vpack.c.b16 %v2031, %v2031
      %v2096 = vpack.c.b16 %v2032, %v2032
      %v2097 = vpack.c.b16 %v2033, %v2033
      %v2098 = vpack.c.b16 %v2034, %v2034
      %v2099 = vpack.c.b16 %v2035, %v2035
      %v2100 = vpack.c.b16 %v2036, %v2036
      %v2101 = vpack.c.b16 %v2037, %v2037
      %v2102 = vpack.c.b16 %v2038, %v2038
      %vm2167 = vcmask 519168
      %2168 = vst.msk [vmem:[%s226] sm:$0xf] %vm2167, %v2039
      %2169 = vst.msk [vmem:[%s226 + $0x4] sm:$0xf] %vm2167, %v2040
      %2170 = vst.msk [vmem:[%s226 + $0x8] sm:$0xf] %vm2167, %v2041
      %2171 = vst.msk [vmem:[%s226 + $0xc] sm:$0xf] %vm2167, %v2042
      %2172 = vst.msk [vmem:[%s226 + $0x10] sm:$0xf] %vm2167, %v2043
      %2173 = vst.msk [vmem:[%s226 + $0x14] sm:$0xf] %vm2167, %v2044
      %2174 = vst.msk [vmem:[%s226 + $0x18] sm:$0xf] %vm2167, %v2045
      %2175 = vst.msk [vmem:[%s226 + $0x1c] sm:$0xf] %vm2167, %v2046
      %2176 = vst.msk [vmem:[%s226 + $0x20] sm:$0xf] %vm2167, %v2047
      %2177 = vst.msk [vmem:[%s226 + $0x24] sm:$0xf] %vm2167, %v2048
      %2178 = vst.msk [vmem:[%s226 + $0x28] sm:$0xf] %vm2167, %v2049
      %2179 = vst.msk [vmem:[%s226 + $0x2c] sm:$0xf] %vm2167, %v2050
      %2180 = vst.msk [vmem:[%s226 + $0x30] sm:$0xf] %vm2167, %v2051
      %2181 = vst.msk [vmem:[%s226 + $0x34] sm:$0xf] %vm2167, %v2052
      %2182 = vst.msk [vmem:[%s226 + $0x38] sm:$0xf] %vm2167, %v2053
      %2183 = vst.msk [vmem:[%s226 + $0x3c] sm:$0xf] %vm2167, %v2054
      %2184 = vst.msk [vmem:[%s226 + $0x40] sm:$0xf] %vm2167, %v2055
      %2185 = vst.msk [vmem:[%s226 + $0x44] sm:$0xf] %vm2167, %v2056
      %2186 = vst.msk [vmem:[%s226 + $0x48] sm:$0xf] %vm2167, %v2057
      %2187 = vst.msk [vmem:[%s226 + $0x4c] sm:$0xf] %vm2167, %v2058
      %2188 = vst.msk [vmem:[%s226 + $0x50] sm:$0xf] %vm2167, %v2059
      %2189 = vst.msk [vmem:[%s226 + $0x54] sm:$0xf] %vm2167, %v2060
      %2190 = vst.msk [vmem:[%s226 + $0x58] sm:$0xf] %vm2167, %v2061
      %2191 = vst.msk [vmem:[%s226 + $0x5c] sm:$0xf] %vm2167, %v2062
      %2192 = vst.msk [vmem:[%s226 + $0x60] sm:$0xf] %vm2167, %v2063
      %2193 = vst.msk [vmem:[%s226 + $0x64] sm:$0xf] %vm2167, %v2064
      %2194 = vst.msk [vmem:[%s226 + $0x68] sm:$0xf] %vm2167, %v2065
      %2195 = vst.msk [vmem:[%s226 + $0x6c] sm:$0xf] %vm2167, %v2066
      %2196 = vst.msk [vmem:[%s226 + $0x70] sm:$0xf] %vm2167, %v2067
      %2197 = vst.msk [vmem:[%s226 + $0x74] sm:$0xf] %vm2167, %v2068
      %2198 = vst.msk [vmem:[%s226 + $0x78] sm:$0xf] %vm2167, %v2069
      %2199 = vst.msk [vmem:[%s226 + $0x7c] sm:$0xf] %vm2167, %v2070
      %2200 = vst.msk [vmem:[%s226 + $0x80] sm:$0xf] %vm2167, %v2071
      %2201 = vst.msk [vmem:[%s226 + $0x84] sm:$0xf] %vm2167, %v2072
      %2202 = vst.msk [vmem:[%s226 + $0x88] sm:$0xf] %vm2167, %v2073
      %2203 = vst.msk [vmem:[%s226 + $0x8c] sm:$0xf] %vm2167, %v2074
      %2204 = vst.msk [vmem:[%s226 + $0x90] sm:$0xf] %vm2167, %v2075
      %2205 = vst.msk [vmem:[%s226 + $0x94] sm:$0xf] %vm2167, %v2076
      %2206 = vst.msk [vmem:[%s226 + $0x98] sm:$0xf] %vm2167, %v2077
      %2207 = vst.msk [vmem:[%s226 + $0x9c] sm:$0xf] %vm2167, %v2078
      %2208 = vst.msk [vmem:[%s226 + $0xa0] sm:$0xf] %vm2167, %v2079
      %2209 = vst.msk [vmem:[%s226 + $0xa4] sm:$0xf] %vm2167, %v2080
      %2210 = vst.msk [vmem:[%s226 + $0xa8] sm:$0xf] %vm2167, %v2081
      %2211 = vst.msk [vmem:[%s226 + $0xac] sm:$0xf] %vm2167, %v2082
      %2212 = vst.msk [vmem:[%s226 + $0xb0] sm:$0xf] %vm2167, %v2083
      %2213 = vst.msk [vmem:[%s226 + $0xb4] sm:$0xf] %vm2167, %v2084
      %2214 = vst.msk [vmem:[%s226 + $0xb8] sm:$0xf] %vm2167, %v2085
      %2215 = vst.msk [vmem:[%s226 + $0xbc] sm:$0xf] %vm2167, %v2086
      %2216 = vst.msk [vmem:[%s226 + $0xc0] sm:$0xf] %vm2167, %v2087
      %2217 = vst.msk [vmem:[%s226 + $0xc4] sm:$0xf] %vm2167, %v2088
      %2218 = vst.msk [vmem:[%s226 + $0xc8] sm:$0xf] %vm2167, %v2089
      %2219 = vst.msk [vmem:[%s226 + $0xcc] sm:$0xf] %vm2167, %v2090
      %2220 = vst.msk [vmem:[%s226 + $0xd0] sm:$0xf] %vm2167, %v2091
      %2221 = vst.msk [vmem:[%s226 + $0xd4] sm:$0xf] %vm2167, %v2092
      %2222 = vst.msk [vmem:[%s226 + $0xd8] sm:$0xf] %vm2167, %v2093
      %2223 = vst.msk [vmem:[%s226 + $0xdc] sm:$0xf] %vm2167, %v2094
      %2224 = vst.msk [vmem:[%s226 + $0xe0] sm:$0xf] %vm2167, %v2095
      %2225 = vst.msk [vmem:[%s226 + $0xe4] sm:$0xf] %vm2167, %v2096
      %2226 = vst.msk [vmem:[%s226 + $0xe8] sm:$0xf] %vm2167, %v2097
      %2227 = vst.msk [vmem:[%s226 + $0xec] sm:$0xf] %vm2167, %v2098
      %2228 = vst.msk [vmem:[%s226 + $0xf0] sm:$0xf] %vm2167, %v2099
      %2229 = vst.msk [vmem:[%s226 + $0xf4] sm:$0xf] %vm2167, %v2100
      %2230 = vst.msk [vmem:[%s226 + $0xf8] sm:$0xf] %vm2167, %v2101
      %2231 = vst.msk [vmem:[%s226 + $0xfc] sm:$0xf] %vm2167, %v2102
      %s2232 = smul.u32 64, %s18
      %p2233 = scmp.lt.s32.totalorder %s2232, 3135
      %s2234 = scalar_select %p2233, %s2232, 3135
      %p2235 = scmp.lt.s32.totalorder %s19, 0
      %s2236 = scalar_select %p2235, %s19, 0
      %s2237 = sadd.s32 %s2236, %s2234
      %s2238 = smul.addr %s2237, 4
      %s2239 = scalar_lea.vmem %s3, %s2238
      // Predicated region
      $region33: #{tpu_custom_call.1} parent=31 // pred_check
        %p2240 = pneg %p124
      $region34: #{tpu_custom_call.1} parent=31 // pred_check_branch
        %2242 = sbr.rel (%p2240) target = $region36
      $region35: #{tpu_custom_call.1} parent=31 // pred_region
        %s2243 = smul.u32 64, %s18
      $region36: #{tpu_custom_call.1} parent=31 // pred_fallthru
        _
    $region32: #{tpu_custom_call.1} parent=5 // pred_fallthru
      _
    %p2244 = scmp.le.s32.totalorder 2, %s9
    // Predicated region
    $region37: #{tpu_custom_call.1} parent=5 // pred_check
      %p2245 = pneg %p2244
    $region38: #{tpu_custom_call.1} parent=5 // pred_check_branch
      %2247 = sbr.rel (%p2245) target = $region40
    $region39: #{tpu_custom_call.1} parent=5 // pred_region
      %s2248 = ssub.s32 %s9, 2
      // Predicated region
      $region41: #{tpu_custom_call.1} parent=39 // pred_check
        %p2249 = pneg %p130
      $region42: #{tpu_custom_call.1} parent=39 // pred_check_branch
        %2251 = sbr.rel (%p2249) target = $region44
      $region43: #{tpu_custom_call.1} parent=39 // pred_region
        %s2252 = smul.u32 64, %s20
        %p2253 = scmp.lt.s32.totalorder %s2252, 3135
        %s2254 = scalar_select %p2253, %s2252, 3135
        %p2255 = scmp.lt.s32.totalorder %s21, 0
        %s2256 = scalar_select %p2255, %s21, 0
        %s2257 = sadd.s32 %s2256, %s2254
        %s2258 = smul.addr %s2257, 4
        %s2259 = scalar_lea.vmem %s3, %s2258
      $region44: #{tpu_custom_call.1} parent=39 // pred_fallthru
        _
    $region40: #{tpu_custom_call.1} parent=5 // pred_fallthru
      _
  $region6: #{tpu_custom_call.1} parent=0 // loop_footer
    %s13 = sadd.s32 1, %s9
  $region7: #{tpu_custom_call.1} parent=0 // loop_footer_branch
    %8 = sbr.rel target = $region3
  $region8: #{tpu_custom_call.1} parent=0 // loop_exit
    _

</llo_original>
